<compile_context>
chip_gen: v5e
topology: v5e:2x2
jax: 0.10.0
libtpu: 0.0.40
codegen_flags: <defaults>
</compile_context>

<pallas_src>
import jax
import jax.numpy as jnp
from jax.experimental import pallas as pl
from jax.experimental.pallas import tpu as pltpu


# ----------------------------------------------------------------------------
# Stage 1: softmax / packed sort key / per-tile partial sums.
# ----------------------------------------------------------------------------
def _softmax_pack_kernel(x_ref, tgt_ref, key_ref, fgp_ref, pkp_ref):
    """x_ref: (C, T) logits;  tgt_ref: (1, T) int32 targets.

    key_ref: (C, T) i32   negated packed sort key: err bits (LSB cleared) | fg bit
    fgp_ref: (C, 128) f32 per-class positive count for this tile in lane 0
    pkp_ref: (1, 128) f32 sum of log_softmax at the target class in lane 0 (NLL)
    """
    x = x_ref[...].astype(jnp.float32)
    c, t = x.shape

    m = jnp.max(x, axis=0, keepdims=True)
    e = jnp.exp(x - m)
    s = jnp.sum(e, axis=0, keepdims=True)
    probs = e / s                        # F.softmax(inputs) over channels
    logsm = (x - m) - jnp.log(s)         # F.log_softmax(inputs, dim=1)

    class_ids = jax.lax.broadcasted_iota(jnp.int32, (c, t), 0)
    is_fg = class_ids == tgt_ref[...]    # (C, T) one-hot target mask
    fg_f = is_fg.astype(jnp.float32)
    fg_i = is_fg.astype(jnp.int32)

    # err >= 0, so its f32 bit pattern is monotone as a signed int32.  Clear the
    # LSB (<= 1 ulp perturbation) and stash the one-hot bit there, then negate so
    # an ascending XLA sort yields descending-error order.
    err = jnp.abs(fg_f - probs)
    err_bits = pltpu.bitcast(err, jnp.int32)
    key_ref[...] = -((err_bits & jnp.int32(-2)) | fg_i)

    fg_sums = jnp.sum(fg_f, axis=1, keepdims=True)              # (C, 1) exact counts
    pick = jnp.sum(fg_f * logsm, axis=1, keepdims=True)         # (C, 1)
    pick_total = jnp.sum(pick, axis=0, keepdims=True)           # (1, 1)

    lane_c = jax.lax.broadcasted_iota(jnp.int32, (c, 128), 1)
    fgp_ref[...] = jnp.where(lane_c == 0, fg_sums, 0.0)
    lane_1 = jax.lax.broadcasted_iota(jnp.int32, (1, 128), 1)
    pkp_ref[...] = jnp.where(lane_1 == 0, pick_total, 0.0)


# ----------------------------------------------------------------------------
# Stage 3: tiled Lovasz-softmax reduction over descending-sorted pixels.
# ----------------------------------------------------------------------------
def _lovasz_kernel(neg_ref, gts_ref, loss_ref, tri_ref, cum_ref):
    """One tile along the sorted pixel axis (sequential grid, running carry).

    neg_ref:  (C, T) i32  negated packed keys, globally sorted ascending
    gts_ref:  (C, 1) f32  per-class total positives
    loss_ref: (1, 1) resident accumulator (mean-over-classes Lovasz loss)
    tri_ref:  (T, T) bf16 scratch, tri[j,i] = (j <= i), filled once at step 0
    cum_ref:  (C, 1) f32  scratch carry: positives seen before this tile
    """
    i = pl.program_id(0)
    c, t = neg_ref.shape

    @pl.when(i == 0)
    def _():
        loss_ref[...] = jnp.zeros_like(loss_ref)
        cum_ref[...] = jnp.zeros_like(cum_ref)
        row = jax.lax.broadcasted_iota(jnp.int32, (t, t), 0)
        col = jax.lax.broadcasted_iota(jnp.int32, (t, t), 1)
        tri_ref[...] = (row <= col).astype(tri_ref.dtype)

    key = -neg_ref[...]                                       # packed (err | fg)
    fg_f = (key & 1).astype(jnp.float32)                      # one-hot mask
    err = pltpu.bitcast(key & jnp.int32(-2), jnp.float32)     # |onehot - prob|
    gts = gts_ref[...]
    carry = cum_ref[...]

    # Running inclusive cumsum of positives: bf16 x bf16 tri matmul with f32
    # accumulation (exact for 0/1 counts) plus the cross-tile carry.
    cum_fg = jnp.dot(fg_f.astype(jnp.bfloat16), tri_ref[...],
                     preferred_element_type=jnp.float32) + carry

    lane = jax.lax.broadcasted_iota(jnp.int32, (c, t), 1)
    pos = (lane + (i * t + 1)).astype(jnp.float32)            # global 1-based positions

    # jaccard at this position, and at the previous position (recomputed from the
    # exclusive cumsum: handles both the within-tile shift and the tile boundary,
    # so no roll / dmat / jlast carry is needed).  union >= max(gts, pos) >= 1;
    # the previous-position union is 0 only at global pos 1 for an absent class,
    # where grad must equal jaccard itself (prev := 0).
    jac = 1.0 - (gts - cum_fg) / (gts + (pos - cum_fg))
    cum_prev = cum_fg - fg_f
    union_prev = gts + ((pos - 1.0) - cum_prev)
    jac_prev = jnp.where(union_prev > 0.0,
                         1.0 - (gts - cum_prev) / union_prev, 0.0)

    per_class = jnp.sum(err * (jac - jac_prev), axis=1, keepdims=True)
    loss_ref[...] = loss_ref[...] + jnp.sum(per_class, axis=0, keepdims=True) * (1.0 / c)

    cum_ref[...] = carry + jnp.sum(fg_f, axis=1, keepdims=True)


# ----------------------------------------------------------------------------
# Wrapper
# ----------------------------------------------------------------------------
def _pick_tile(n, max_tile):
    """Largest multiple-of-128 tile <= max_tile dividing n (or n itself if small)."""
    if n <= max_tile:
        return n
    t = (max_tile // 128) * 128
    while t > 128 and n % t != 0:
        t -= 128
    return t


def loce_loss_2d(inputs, targets, *, pixel_tile=16384, lovasz_tile=2048):
    """LoCeLoss2d forward.

    inputs:  (B, C, H, W) float logits (NCHW, like PyTorch)
    targets: (B, H, W)    int class indices in [0, C)

    lovasz_tile: keep <= 2048 on v7x (tri scratch = 2*T^2 bytes); v5e/v6e with
    128 MiB VMEM can use 4096.
    """
    b, c, h, w = inputs.shape
    hw = h * w
    n = b * hw
    assert hw % 128 == 0, "H*W must be a multiple of 128"

    tile_n = _pick_tile(hw, pixel_tile)
    num_hw_tiles = hw // tile_n
    num_steps = b * num_hw_tiles

    # Free reshapes only — no host-side transpose of the logits.
    x = inputs.reshape(b, c, hw)
    tgt = targets.reshape(b, 1, hw).astype(jnp.int32)

    neg_key, fg_part, pick_part = pl.pallas_call(
        _softmax_pack_kernel,
        out_shape=(
            jax.ShapeDtypeStruct((c, n), jnp.int32),                 # packed keys, (C, B*HW)
            jax.ShapeDtypeStruct((c, num_steps * 128), jnp.float32),  # per-tile fg counts
            jax.ShapeDtypeStruct((1, num_steps * 128), jnp.float32),  # per-tile picked log-prob sums
        ),
        grid_spec=pltpu.PrefetchScalarGridSpec(
            num_scalar_prefetch=0,
            grid=(b, num_hw_tiles),
            in_specs=[
                pl.BlockSpec((None, c, tile_n), lambda bb, ii: (bb, 0, ii)),
                pl.BlockSpec((None, 1, tile_n), lambda bb, ii: (bb, 0, ii)),
            ],
            out_specs=[
                pl.BlockSpec((c, tile_n), lambda bb, ii: (0, bb * num_hw_tiles + ii)),
                pl.BlockSpec((c, 128), lambda bb, ii: (0, bb * num_hw_tiles + ii)),
                pl.BlockSpec((1, 128), lambda bb, ii: (0, bb * num_hw_tiles + ii)),
            ],
        ),
        compiler_params=pltpu.CompilerParams(
            dimension_semantics=("parallel", "parallel"),   # no resident accumulator
            vmem_limit_bytes=32 * 1024 * 1024,
        ),
    )(x, tgt)

    # NLLLoss2d(weight=None, size_average=True): mean over pixels of -log p[target].
    nll = -jnp.sum(pick_part) / n
    # Per-class total positives (exact f32 counts, summed from per-tile partials).
    gts = jnp.sum(fg_part, axis=1).reshape(c, 1)

    # TODO(synk): torch.sort(descending=True) over all flattened pixels has no clean
    # Pallas TPU equivalent; the per-class sort stays in XLA.  Ascending sort of the
    # negated packed key == descending sort by error.  Tied errors may be ordered
    # differently from torch.sort, but the Lovasz sum is invariant within tied blocks.
    neg_sorted = jax.lax.sort(neg_key, dimension=1)

    t_lov = _pick_tile(n, lovasz_tile)
    vmem_stage3 = max(32 * 1024 * 1024, 2 * t_lov * t_lov + (8 << 20))

    lovasz = pl.pallas_call(
        _lovasz_kernel,
        out_shape=jax.ShapeDtypeStruct((1, 1), jnp.float32),
        grid_spec=pltpu.PrefetchScalarGridSpec(
            num_scalar_prefetch=0,
            grid=(n // t_lov,),
            in_specs=[
                pl.BlockSpec((c, t_lov), lambda i: (0, i)),
                pl.BlockSpec((c, 1), lambda i: (0, 0)),          # gts, resident
            ],
            out_specs=pl.BlockSpec((1, 1), lambda i: (0, 0)),    # resident loss acc
            scratch_shapes=[
                pltpu.VMEM((t_lov, t_lov), jnp.bfloat16),   # tri, filled once in-kernel
                pltpu.VMEM((c, 1), jnp.float32),            # running cum-positives carry
            ],
        ),
        compiler_params=pltpu.CompilerParams(
            dimension_semantics=("arbitrary",),    # sequential carry over tiles
            vmem_limit_bytes=vmem_stage3,
        ),
    )(neg_sorted, gts)

    return lovasz[0, 0] + nll


# ----------------------------------------------------------------------------
# Pure-JAX reference mirroring the PyTorch semantics
# ----------------------------------------------------------------------------
def _reference(inputs, targets):
    b, c, h, w = inputs.shape
    x = inputs.astype(jnp.float32)
    logsm = jax.nn.log_softmax(x, axis=1)
    probs = jax.nn.softmax(x, axis=1)
    oh = jax.nn.one_hot(targets, c, axis=1, dtype=jnp.float32)   # (B, C, H, W)
    nll = -jnp.mean(jnp.sum(oh * logsm, axis=1))

    pr = jnp.transpose(probs, (0, 2, 3, 1)).reshape(-1, c)       # (N, C)
    lab = targets.reshape(-1)
    losses = []
    for cls in range(c):
        fgc = (lab == cls).astype(jnp.float32)
        errs = jnp.abs(fgc - pr[:, cls])
        order = jnp.argsort(-errs)
        errs_s = errs[order]
        fg_s = fgc[order]
        gts = jnp.sum(fg_s)
        inter = gts - jnp.cumsum(fg_s)
        union = gts + jnp.cumsum(1.0 - fg_s)
        jac = 1.0 - inter / union
        grad = jnp.concatenate([jac[:1], jac[1:] - jac[:-1]])
        losses.append(jnp.dot(errs_s, grad))
    return jnp.mean(jnp.stack(losses)) + nll


if __name__ == "__main__":
    key = jax.random.PRNGKey(0)
    k1, k2 = jax.random.split(key)
    B, C, H, W = 2, 4, 16, 16
    inputs = jax.random.normal(k1, (B, C, H, W), dtype=jnp.float32)
    targets = jax.random.randint(k2, (B, H, W), 0, C, dtype=jnp.int32)

    loss = jax.jit(loce_loss_2d)(inputs, targets)
    loss = jax.block_until_ready(loss)

    ref = _reference(inputs, targets)
    assert jnp.allclose(loss, ref, rtol=1e-4, atol=1e-4), (float(loss), float(ref))
    print("KERNEL_OK")
</pallas_src>

<mosaic_0001>
module attributes {stable_mosaic.version = 11 : i64} {
  func.func @_softmax_pack_kernel(%arg0: i32, %arg1: i32, %arg2: memref<1x4x256xf32, #tpu.memory_space<vmem>>, %arg3: memref<1x1x256xi32, #tpu.memory_space<vmem>>, %arg4: memref<4x256xi32, #tpu.memory_space<vmem>>, %arg5: memref<4x128xf32, #tpu.memory_space<vmem>>, %arg6: memref<1x128xf32, #tpu.memory_space<vmem>>) attributes {dimension_semantics = [#tpu.dimension_semantics<parallel>, #tpu.dimension_semantics<parallel>], iteration_bounds = array<i64: 2, 1>, scalar_prefetch = 0 : i64, scratch_operands = 0 : i64, tpu.core_type = #tpu.core_type<tc>, window_params = [{transform_indices = @transform_0, window_bounds = array<i64: 1, 4, 256>}, {transform_indices = @transform_1, window_bounds = array<i64: 1, 1, 256>}, {transform_indices = @transform_2, window_bounds = array<i64: 4, 256>}, {transform_indices = @transform_3, window_bounds = array<i64: 4, 128>}, {transform_indices = @transform_4, window_bounds = array<i64: 1, 128>}]} {
    %c0 = arith.constant 0 : index
    %c0_0 = arith.constant 0 : index
    %c0_1 = arith.constant 0 : index
    %0 = vector.load %arg2[%c0, %c0_0, %c0_1] : memref<1x4x256xf32, #tpu.memory_space<vmem>>, vector<1x4x256xf32>
    %1 = vector.shape_cast %0 : vector<1x4x256xf32> to vector<4x256xf32>
    %cst = arith.constant dense<0xFF800000> : vector<256xf32>
    %2 = vector.multi_reduction <maximumf>, %1, %cst [0] : vector<4x256xf32> to vector<256xf32>
    %3 = vector.shape_cast %2 : vector<256xf32> to vector<1x256xf32>
    %4 = vector.broadcast %3 : vector<1x256xf32> to vector<4x256xf32>
    %5 = arith.subf %1, %4 : vector<4x256xf32>
    %6 = math.exp %5 : vector<4x256xf32>
    %cst_2 = arith.constant dense<0.000000e+00> : vector<256xf32>
    %7 = vector.multi_reduction <add>, %6, %cst_2 [0] : vector<4x256xf32> to vector<256xf32>
    %8 = vector.shape_cast %7 : vector<256xf32> to vector<1x256xf32>
    %9 = vector.broadcast %8 : vector<1x256xf32> to vector<4x256xf32>
    %10 = arith.divf %6, %9 : vector<4x256xf32>
    %11 = vector.broadcast %3 : vector<1x256xf32> to vector<4x256xf32>
    %12 = arith.subf %1, %11 : vector<4x256xf32>
    %13 = math.log %8 : vector<1x256xf32>
    %14 = vector.broadcast %13 : vector<1x256xf32> to vector<4x256xf32>
    %15 = arith.subf %12, %14 : vector<4x256xf32>
    %16 = tpu.iota {dimensions = array<i32: 0>} : vector<4x256xi32>
    %c0_3 = arith.constant 0 : index
    %c0_4 = arith.constant 0 : index
    %c0_5 = arith.constant 0 : index
    %17 = vector.load %arg3[%c0_3, %c0_4, %c0_5] : memref<1x1x256xi32, #tpu.memory_space<vmem>>, vector<1x1x256xi32>
    %18 = vector.shape_cast %17 : vector<1x1x256xi32> to vector<1x256xi32>
    %19 = vector.broadcast %18 : vector<1x256xi32> to vector<4x256xi32>
    %20 = arith.cmpi eq, %16, %19 : vector<4x256xi32>
    %21 = arith.extui %20 : vector<4x256xi1> to vector<4x256xi32>
    %22 = arith.sitofp %21 : vector<4x256xi32> to vector<4x256xf32>
    %23 = arith.extui %20 : vector<4x256xi1> to vector<4x256xi32>
    %24 = arith.subf %22, %10 : vector<4x256xf32>
    %25 = math.absf %24 : vector<4x256xf32>
    %26 = tpu.bitcast %25 : vector<4x256xf32> -> vector<4x256xi32>
    %c-2_i32 = arith.constant -2 : i32
    %27 = vector.broadcast %c-2_i32 : i32 to vector<4x256xi32>
    %28 = arith.andi %26, %27 : vector<4x256xi32>
    %29 = arith.ori %28, %23 : vector<4x256xi32>
    %c0_i32 = arith.constant 0 : i32
    %30 = vector.broadcast %c0_i32 : i32 to vector<4x256xi32>
    %31 = arith.subi %30, %29 : vector<4x256xi32>
    %c0_6 = arith.constant 0 : index
    %c0_7 = arith.constant 0 : index
    %32 = vector.load %arg4[%c0_6, %c0_7] : memref<4x256xi32, #tpu.memory_space<vmem>>, vector<4x256xi32>
    tpu.vector_store %arg4[%c0_6, %c0_7], %31 {strides = array<i32>} : memref<4x256xi32, #tpu.memory_space<vmem>>, vector<4x256xi32>,
    %cst_8 = arith.constant dense<0.000000e+00> : vector<4xf32>
    %33 = vector.multi_reduction <add>, %22, %cst_8 [1] : vector<4x256xf32> to vector<4xf32>
    %34 = vector.shape_cast %33 : vector<4xf32> to vector<4x1xf32>
    %35 = arith.mulf %22, %15 : vector<4x256xf32>
    %cst_9 = arith.constant dense<0.000000e+00> : vector<4xf32>
    %36 = vector.multi_reduction <add>, %35, %cst_9 [1] : vector<4x256xf32> to vector<4xf32>
    %37 = vector.shape_cast %36 : vector<4xf32> to vector<4x1xf32>
    %cst_10 = arith.constant dense<0.000000e+00> : vector<1xf32>
    %38 = vector.multi_reduction <add>, %37, %cst_10 [0] : vector<4x1xf32> to vector<1xf32>
    %39 = vector.shape_cast %38 : vector<1xf32> to vector<1x1xf32>
    %40 = tpu.iota {dimensions = array<i32: 1>} : vector<4x128xi32>
    %c0_i32_11 = arith.constant 0 : i32
    %41 = vector.broadcast %c0_i32_11 : i32 to vector<4x128xi32>
    %42 = arith.cmpi eq, %40, %41 : vector<4x128xi32>
    %cst_12 = arith.constant 0.000000e+00 : f32
    %43 = vector.shape_cast %34 : vector<4x1xf32> to vector<4x1xf32>
    %44 = vector.broadcast %43 : vector<4x1xf32> to vector<4x128xf32>
    %45 = vector.broadcast %cst_12 : f32 to vector<4x128xf32>
    %46 = arith.select %42, %44, %45 : vector<4x128xi1>, vector<4x128xf32>
    %c0_13 = arith.constant 0 : index
    %c0_14 = arith.constant 0 : index
    %47 = vector.load %arg5[%c0_13, %c0_14] : memref<4x128xf32, #tpu.memory_space<vmem>>, vector<4x128xf32>
    tpu.vector_store %arg5[%c0_13, %c0_14], %46 {strides = array<i32>} : memref<4x128xf32, #tpu.memory_space<vmem>>, vector<4x128xf32>,
    %48 = tpu.iota {dimensions = array<i32: 1>} : vector<1x128xi32>
    %c0_i32_15 = arith.constant 0 : i32
    %49 = vector.broadcast %c0_i32_15 : i32 to vector<1x128xi32>
    %50 = arith.cmpi eq, %48, %49 : vector<1x128xi32>
    %cst_16 = arith.constant 0.000000e+00 : f32
    %51 = vector.shape_cast %39 : vector<1x1xf32> to vector<1x1xf32>
    %52 = vector.broadcast %51 : vector<1x1xf32> to vector<1x128xf32>
    %53 = vector.broadcast %cst_16 : f32 to vector<1x128xf32>
    %54 = arith.select %50, %52, %53 : vector<1x128xi1>, vector<1x128xf32>
    %c0_17 = arith.constant 0 : index
    %c0_18 = arith.constant 0 : index
    %55 = vector.load %arg6[%c0_17, %c0_18] : memref<1x128xf32, #tpu.memory_space<vmem>>, vector<1x128xf32>
    tpu.vector_store %arg6[%c0_17, %c0_18], %54 {strides = array<i32>} : memref<1x128xf32, #tpu.memory_space<vmem>>, vector<1x128xf32>,
    return
  }
  func.func @transform_0(%arg0: i32, %arg1: i32) -> (i32, i32, i32) {
    %c0_i32 = arith.constant 0 : i32
    %c0_i32_0 = arith.constant 0 : i32
    return %arg0, %c0_i32, %arg1 : i32, i32, i32
  }
  func.func @transform_1(%arg0: i32, %arg1: i32) -> (i32, i32, i32) {
    %c0_i32 = arith.constant 0 : i32
    %c0_i32_0 = arith.constant 0 : i32
    return %arg0, %c0_i32, %arg1 : i32, i32, i32
  }
  func.func @transform_2(%arg0: i32, %arg1: i32) -> (i32, i32) {
    %c1_i32 = arith.constant 1 : i32
    %0 = arith.muli %arg0, %c1_i32 : i32
    %1 = arith.addi %0, %arg1 : i32
    %c0_i32 = arith.constant 0 : i32
    %c0_i32_0 = arith.constant 0 : i32
    return %c0_i32, %1 : i32, i32
  }
  func.func @transform_3(%arg0: i32, %arg1: i32) -> (i32, i32) {
    %c1_i32 = arith.constant 1 : i32
    %0 = arith.muli %arg0, %c1_i32 : i32
    %1 = arith.addi %0, %arg1 : i32
    %c0_i32 = arith.constant 0 : i32
    %c0_i32_0 = arith.constant 0 : i32
    return %c0_i32, %1 : i32, i32
  }
  func.func @transform_4(%arg0: i32, %arg1: i32) -> (i32, i32) {
    %c1_i32 = arith.constant 1 : i32
    %0 = arith.muli %arg0, %c1_i32 : i32
    %1 = arith.addi %0, %arg1 : i32
    %c0_i32 = arith.constant 0 : i32
    %c0_i32_0 = arith.constant 0 : i32
    return %c0_i32, %1 : i32, i32
  }
}

module attributes {stable_mosaic.version = 11 : i64} {
  func.func @_lovasz_kernel(%arg0: i32, %arg1: memref<4x512xi32, #tpu.memory_space<vmem>>, %arg2: memref<4x1xf32, #tpu.memory_space<vmem>>, %arg3: memref<1x1xf32, #tpu.memory_space<vmem>>, %arg4: memref<512x512xbf16, #tpu.memory_space<vmem>>, %arg5: memref<4x1xf32, #tpu.memory_space<vmem>>) attributes {dimension_semantics = [#tpu.dimension_semantics<arbitrary>], iteration_bounds = array<i64: 1>, scalar_prefetch = 0 : i64, scratch_operands = 2 : i64, tpu.core_type = #tpu.core_type<tc>, window_params = [{transform_indices = @transform_0, window_bounds = array<i64: 4, 512>}, {pipeline_mode = #tpu.pipeline_mode<synchronous>, transform_indices = @transform_1, window_bounds = array<i64: 4, 1>}, {pipeline_mode = #tpu.pipeline_mode<synchronous>, transform_indices = @transform_2, window_bounds = array<i64: 1, 1>}]} {
    %c0_i32 = arith.constant 0 : i32
    %0 = arith.cmpi eq, %arg0, %c0_i32 : i32
    %1 = arith.extui %0 : i1 to i32
    %c0_i32_0 = arith.constant 0 : i32
    %2 = arith.cmpi ne, %1, %c0_i32_0 : i32
    scf.if %2 {
      %cst_25 = arith.constant 0.000000e+00 : f32
      %63 = vector.broadcast %cst_25 : f32 to vector<1x1xf32>
      %c0_26 = arith.constant 0 : index
      %c0_27 = arith.constant 0 : index
      %64 = vector.load %arg3[%c0_26, %c0_27] : memref<1x1xf32, #tpu.memory_space<vmem>>, vector<1x1xf32>
      tpu.vector_store %arg3[%c0_26, %c0_27], %63 {strides = array<i32>} : memref<1x1xf32, #tpu.memory_space<vmem>>, vector<1x1xf32>,
      %cst_28 = arith.constant 0.000000e+00 : f32
      %65 = vector.broadcast %cst_28 : f32 to vector<4x1xf32>
      %c0_29 = arith.constant 0 : index
      %c0_30 = arith.constant 0 : index
      %66 = vector.load %arg5[%c0_29, %c0_30] : memref<4x1xf32, #tpu.memory_space<vmem>>, vector<4x1xf32>
      tpu.vector_store %arg5[%c0_29, %c0_30], %65 {strides = array<i32>} : memref<4x1xf32, #tpu.memory_space<vmem>>, vector<4x1xf32>,
      %67 = tpu.iota {dimensions = array<i32: 0>} : vector<512x512xi32>
      %68 = tpu.iota {dimensions = array<i32: 1>} : vector<512x512xi32>
      %69 = arith.cmpi sle, %67, %68 : vector<512x512xi32>
      %70 = arith.extui %69 : vector<512x512xi1> to vector<512x512xi32>
      %71 = arith.sitofp %70 : vector<512x512xi32> to vector<512x512xf32>
      %72 = arith.truncf %71 : vector<512x512xf32> to vector<512x512xbf16>
      %c0_31 = arith.constant 0 : index
      %c0_32 = arith.constant 0 : index
      %73 = vector.load %arg4[%c0_31, %c0_32] : memref<512x512xbf16, #tpu.memory_space<vmem>>, vector<512x512xbf16>
      tpu.vector_store %arg4[%c0_31, %c0_32], %72 {strides = array<i32>} : memref<512x512xbf16, #tpu.memory_space<vmem>>, vector<512x512xbf16>,
    } else {
    }
    %c0 = arith.constant 0 : index
    %c0_1 = arith.constant 0 : index
    %3 = vector.load %arg1[%c0, %c0_1] : memref<4x512xi32, #tpu.memory_space<vmem>>, vector<4x512xi32>
    %c0_i32_2 = arith.constant 0 : i32
    %4 = vector.broadcast %c0_i32_2 : i32 to vector<4x512xi32>
    %5 = arith.subi %4, %3 : vector<4x512xi32>
    %c1_i32 = arith.constant 1 : i32
    %6 = vector.broadcast %c1_i32 : i32 to vector<4x512xi32>
    %7 = arith.andi %5, %6 : vector<4x512xi32>
    %8 = arith.sitofp %7 : vector<4x512xi32> to vector<4x512xf32>
    %c-2_i32 = arith.constant -2 : i32
    %9 = vector.broadcast %c-2_i32 : i32 to vector<4x512xi32>
    %10 = arith.andi %5, %9 : vector<4x512xi32>
    %11 = tpu.bitcast %10 : vector<4x512xi32> -> vector<4x512xf32>
    %c0_3 = arith.constant 0 : index
    %c0_4 = arith.constant 0 : index
    %12 = vector.load %arg2[%c0_3, %c0_4] : memref<4x1xf32, #tpu.memory_space<vmem>>, vector<4x1xf32>
    %c0_5 = arith.constant 0 : index
    %c0_6 = arith.constant 0 : index
    %13 = vector.load %arg5[%c0_5, %c0_6] : memref<4x1xf32, #tpu.memory_space<vmem>>, vector<4x1xf32>
    %14 = arith.truncf %8 : vector<4x512xf32> to vector<4x512xbf16>
    %c0_7 = arith.constant 0 : index
    %c0_8 = arith.constant 0 : index
    %15 = vector.load %arg4[%c0_7, %c0_8] : memref<512x512xbf16, #tpu.memory_space<vmem>>, vector<512x512xbf16>
    %cst = arith.constant dense<0.000000e+00> : vector<4x512xf32>
    %16 = tpu.matmul %14, %15, %cst {dimension_numbers = #tpu.dot_dimension_numbers<[1], [0], [0], [1], [0, 0, 1, 1], [], []>} : vector<4x512xbf16>, vector<512x512xbf16>, vector<4x512xf32> -> vector<4x512xf32>
    %17 = vector.broadcast %13 : vector<4x1xf32> to vector<4x512xf32>
    %18 = arith.addf %16, %17 : vector<4x512xf32>
    %19 = tpu.iota {dimensions = array<i32: 1>} : vector<4x512xi32>
    %c512_i32 = arith.constant 512 : i32
    %20 = arith.muli %arg0, %c512_i32 : i32
    %c1_i32_9 = arith.constant 1 : i32
    %21 = arith.addi %20, %c1_i32_9 : i32
    %22 = vector.broadcast %21 : i32 to vector<4x512xi32>
    %23 = arith.addi %19, %22 : vector<4x512xi32>
    %24 = arith.sitofp %23 : vector<4x512xi32> to vector<4x512xf32>
    %25 = vector.broadcast %12 : vector<4x1xf32> to vector<4x512xf32>
    %26 = arith.subf %25, %18 : vector<4x512xf32>
    %27 = arith.subf %24, %18 : vector<4x512xf32>
    %28 = vector.broadcast %12 : vector<4x1xf32> to vector<4x512xf32>
    %29 = arith.addf %28, %27 : vector<4x512xf32>
    %30 = arith.divf %26, %29 : vector<4x512xf32>
    %cst_10 = arith.constant 1.000000e+00 : f32
    %31 = vector.broadcast %cst_10 : f32 to vector<4x512xf32>
    %32 = arith.subf %31, %30 : vector<4x512xf32>
    %33 = arith.subf %18, %8 : vector<4x512xf32>
    %cst_11 = arith.constant 1.000000e+00 : f32
    %34 = vector.broadcast %cst_11 : f32 to vector<4x512xf32>
    %35 = arith.subf %24, %34 : vector<4x512xf32>
    %36 = arith.subf %35, %33 : vector<4x512xf32>
    %37 = vector.broadcast %12 : vector<4x1xf32> to vector<4x512xf32>
    %38 = arith.addf %37, %36 : vector<4x512xf32>
    %cst_12 = arith.constant 0.000000e+00 : f32
    %39 = vector.broadcast %cst_12 : f32 to vector<4x512xf32>
    %40 = arith.cmpf ogt, %38, %39 : vector<4x512xf32>
    %41 = vector.broadcast %12 : vector<4x1xf32> to vector<4x512xf32>
    %42 = arith.subf %41, %33 : vector<4x512xf32>
    %43 = arith.divf %42, %38 : vector<4x512xf32>
    %cst_13 = arith.constant 1.000000e+00 : f32
    %44 = vector.broadcast %cst_13 : f32 to vector<4x512xf32>
    %45 = arith.subf %44, %43 : vector<4x512xf32>
    %cst_14 = arith.constant 0.000000e+00 : f32
    %46 = vector.broadcast %cst_14 : f32 to vector<4x512xf32>
    %47 = arith.select %40, %45, %46 : vector<4x512xi1>, vector<4x512xf32>
    %48 = arith.subf %32, %47 : vector<4x512xf32>
    %49 = arith.mulf %11, %48 : vector<4x512xf32>
    %cst_15 = arith.constant dense<0.000000e+00> : vector<4xf32>
    %50 = vector.multi_reduction <add>, %49, %cst_15 [1] : vector<4x512xf32> to vector<4xf32>
    %51 = vector.shape_cast %50 : vector<4xf32> to vector<4x1xf32>
    %c0_16 = arith.constant 0 : index
    %c0_17 = arith.constant 0 : index
    %52 = vector.load %arg3[%c0_16, %c0_17] : memref<1x1xf32, #tpu.memory_space<vmem>>, vector<1x1xf32>
    %cst_18 = arith.constant dense<0.000000e+00> : vector<1xf32>
    %53 = vector.multi_reduction <add>, %51, %cst_18 [0] : vector<4x1xf32> to vector<1xf32>
    %54 = vector.shape_cast %53 : vector<1xf32> to vector<1x1xf32>
    %cst_19 = arith.constant 2.500000e-01 : f32
    %55 = vector.broadcast %cst_19 : f32 to vector<1x1xf32>
    %56 = arith.mulf %54, %55 : vector<1x1xf32>
    %57 = arith.addf %52, %56 : vector<1x1xf32>
    %c0_20 = arith.constant 0 : index
    %c0_21 = arith.constant 0 : index
    %58 = vector.load %arg3[%c0_20, %c0_21] : memref<1x1xf32, #tpu.memory_space<vmem>>, vector<1x1xf32>
    tpu.vector_store %arg3[%c0_20, %c0_21], %57 {strides = array<i32>} : memref<1x1xf32, #tpu.memory_space<vmem>>, vector<1x1xf32>,
    %cst_22 = arith.constant dense<0.000000e+00> : vector<4xf32>
    %59 = vector.multi_reduction <add>, %8, %cst_22 [1] : vector<4x512xf32> to vector<4xf32>
    %60 = vector.shape_cast %59 : vector<4xf32> to vector<4x1xf32>
    %61 = arith.addf %13, %60 : vector<4x1xf32>
    %c0_23 = arith.constant 0 : index
    %c0_24 = arith.constant 0 : index
    %62 = vector.load %arg5[%c0_23, %c0_24] : memref<4x1xf32, #tpu.memory_space<vmem>>, vector<4x1xf32>
    tpu.vector_store %arg5[%c0_23, %c0_24], %61 {strides = array<i32>} : memref<4x1xf32, #tpu.memory_space<vmem>>, vector<4x1xf32>,
    return
  }
  func.func @transform_0(%arg0: i32) -> (i32, i32) {
    %c0_i32 = arith.constant 0 : i32
    %c0_i32_0 = arith.constant 0 : i32
    return %c0_i32, %arg0 : i32, i32
  }
  func.func @transform_1(%arg0: i32) -> (i32, i32) {
    %c0_i32 = arith.constant 0 : i32
    %c0_i32_0 = arith.constant 0 : i32
    %c0_i32_1 = arith.constant 0 : i32
    return %c0_i32, %c0_i32_0 : i32, i32
  }
  func.func @transform_2(%arg0: i32) -> (i32, i32) {
    %c0_i32 = arith.constant 0 : i32
    %c0_i32_0 = arith.constant 0 : i32
    %c0_i32_1 = arith.constant 0 : i32
    return %c0_i32, %c0_i32_0 : i32, i32
  }
}

</mosaic_0001>

<llo_original>
// kernel: loce_loss_2d.2
$region0: #{loce_loss_2d.2}
  #allocation0 [shape = 'u32[]', space=smem, size = 0x4, offset = 0x4, fixed_abs, tag = 'smem constant byte address 0x4 - core index']
  #allocation1 [shape = 'u32[72,128]{1,0:T(1,128)}', space=vmem, size = 0x9000, scoped, tag = 'internal scratch']
  %s0 = inlined_call_operand.vmem [shape: f32[2,4,256], index: 0, kind: input, shape index: {}]
  %s1 = inlined_call_operand.vmem [shape: s32[2,1,256], index: 1, kind: input, shape index: {}]
  %s2 = inlined_call_operand.vmem [shape: s32[4,512], index: 2, kind: output, shape index: {0}]
  %s3 = inlined_call_operand.vmem [shape: f32[4,256], index: 3, kind: output, shape index: {1}]
  %s4 = inlined_call_operand.vmem [shape: f32[1,256], index: 4, kind: output, shape index: {2}]
  %5 = xla_tuple %s2, %s3, %s4
  %s6 = sld [smem:[#allocation0]]
  $region57: #{loce_loss_2d.2} parent=0
    _
  %s8 = ssub.s32 1, %s6
  %s9 = scalar_select 0, %s8, %s6
  loop: start=0, step=1, limit=4
  $region2: #{loce_loss_2d.2} parent=0 // loop_pre_header
    _
  $region3: #{loce_loss_2d.2} parent=0 // loop_header
    %s11 = sphi 0, %s15
    %p12 = scmp.ge.s32.totalorder %s11, 4
    %s18 = sphi 0, %s30
    %s19 = sphi 0, %s26
    %s20 = sphi 0, %s18
    %s21 = sphi 0, %s19
    %s22 = sphi 0, %s20
    %s23 = sphi 0, %s21
    %s35 = sphi 0, %s37
    %s38 = sphi 0, %s35
    %s39 = sphi 0, %s38
    %s55 = sphi 0, %s39
    %s63 = sphi 0, %s65
    %s66 = sphi 0, %s63
    %s67 = sphi 0, %s66
    %s83 = sphi 0, %s67
    %s91 = sphi 0, %s93
    %s94 = sphi 0, %s91
    %s95 = sphi 0, %s94
    %s111 = sphi 0, %s95
    %s119 = sphi 0, %s121
    %s122 = sphi 0, %s119
    %s123 = sphi 0, %s122
    %s139 = sphi 0, %s123
    %s147 = sphi 0, %s149
    %s150 = sphi 0, %s147
    %s151 = sphi 0, %s150
    %s167 = sphi 0, %s151
  $region4: #{loce_loss_2d.2} parent=0 // loop_header_branch
    %14 = sbr.rel (%p12) target = $region8
  $region5: #{loce_loss_2d.2} parent=0 // loop_body
    %s16 = ssub.s32 %s11, 1
    %s17 = ssub.s32 %s11, 2
    %s24 = sadd.s32 1, %s19
    %p25 = scmp.ge.s32.totalorder %s24, 1
    %s26 = scalar_select %p25, 0, %s24
    %s27 = sadd.s32 1, %s18
    %s28 = scalar_select %p25, %s27, %s18
    %p29 = scmp.ge.s32.totalorder %s28, 2
    %s30 = scalar_select %p29, 0, %s28
    %s31 = ssub.s32 %s18, %s30
    %s32 = ssub.s32 %s19, %s26
    %s33 = sor.u32 %s31, %s32
    %p34 = scmp.eq.s32.totalorder %s33, 0
    %s36 = sadd.s32 %s35, 1
    %s37 = scalar_select %p34, %s35, %s36
    %p40 = pneg %p34
    %p41 = scmp.eq.s32.totalorder %s11, 1
    %p42 = por %p40, %p41
    %p43 = scmp.ne.s32.totalorder %s35, %s38
    %p44 = scmp.eq.s32.totalorder %s11, 0
    %p45 = por %p43, %p44
    %p46 = scmp.ne.s32.totalorder %s35, %s38
    %p47 = scmp.eq.s32.totalorder %s16, 1
    %p48 = por %p46, %p47
    %p49 = scmp.ne.s32.totalorder %s38, %s39
    %p50 = scmp.eq.s32.totalorder %s16, 0
    %p51 = por %p49, %p50
    %p52 = scmp.ne.s32.totalorder %s38, %s39
    %p53 = scmp.eq.s32.totalorder %s17, 1
    %p54 = por %p52, %p53
    %p56 = scmp.ne.s32.totalorder %s39, %s55
    %p57 = scmp.eq.s32.totalorder %s17, 0
    %p58 = por %p56, %p57
    %s59 = ssub.s32 %s18, %s30
    %s60 = ssub.s32 %s19, %s26
    %s61 = sor.u32 %s59, %s60
    %p62 = scmp.eq.s32.totalorder %s61, 0
    %s64 = sadd.s32 %s63, 1
    %s65 = scalar_select %p62, %s63, %s64
    %p68 = pneg %p62
    %p69 = scmp.eq.s32.totalorder %s11, 1
    %p70 = por %p68, %p69
    %p71 = scmp.ne.s32.totalorder %s63, %s66
    %p72 = scmp.eq.s32.totalorder %s11, 0
    %p73 = por %p71, %p72
    %p74 = scmp.ne.s32.totalorder %s63, %s66
    %p75 = scmp.eq.s32.totalorder %s16, 1
    %p76 = por %p74, %p75
    %p77 = scmp.ne.s32.totalorder %s66, %s67
    %p78 = scmp.eq.s32.totalorder %s16, 0
    %p79 = por %p77, %p78
    %p80 = scmp.ne.s32.totalorder %s66, %s67
    %p81 = scmp.eq.s32.totalorder %s17, 1
    %p82 = por %p80, %p81
    %p84 = scmp.ne.s32.totalorder %s67, %s83
    %p85 = scmp.eq.s32.totalorder %s17, 0
    %p86 = por %p84, %p85
    %s87 = sadd.s32 %s18, %s19
    %s88 = sadd.s32 %s30, %s26
    %s89 = ssub.s32 %s87, %s88
    %p90 = scmp.eq.s32.totalorder %s89, 0
    %s92 = sadd.s32 %s91, 1
    %s93 = scalar_select %p90, %s91, %s92
    %p96 = pneg %p90
    %p97 = scmp.eq.s32.totalorder %s11, 1
    %p98 = por %p96, %p97
    %p99 = scmp.ne.s32.totalorder %s91, %s94
    %p100 = scmp.eq.s32.totalorder %s11, 0
    %p101 = por %p99, %p100
    %p102 = scmp.ne.s32.totalorder %s91, %s94
    %p103 = scmp.eq.s32.totalorder %s16, 1
    %p104 = por %p102, %p103
    %p105 = scmp.ne.s32.totalorder %s94, %s95
    %p106 = scmp.eq.s32.totalorder %s16, 0
    %p107 = por %p105, %p106
    %p108 = scmp.ne.s32.totalorder %s94, %s95
    %p109 = scmp.eq.s32.totalorder %s17, 1
    %p110 = por %p108, %p109
    %p112 = scmp.ne.s32.totalorder %s95, %s111
    %p113 = scmp.eq.s32.totalorder %s17, 0
    %p114 = por %p112, %p113
    %s115 = sadd.s32 %s18, %s19
    %s116 = sadd.s32 %s30, %s26
    %s117 = ssub.s32 %s115, %s116
    %p118 = scmp.eq.s32.totalorder %s117, 0
    %s120 = sadd.s32 %s119, 1
    %s121 = scalar_select %p118, %s119, %s120
    %p124 = pneg %p118
    %p125 = scmp.eq.s32.totalorder %s11, 1
    %p126 = por %p124, %p125
    %p127 = scmp.ne.s32.totalorder %s119, %s122
    %p128 = scmp.eq.s32.totalorder %s11, 0
    %p129 = por %p127, %p128
    %p130 = scmp.ne.s32.totalorder %s119, %s122
    %p131 = scmp.eq.s32.totalorder %s16, 1
    %p132 = por %p130, %p131
    %p133 = scmp.ne.s32.totalorder %s122, %s123
    %p134 = scmp.eq.s32.totalorder %s16, 0
    %p135 = por %p133, %p134
    %p136 = scmp.ne.s32.totalorder %s122, %s123
    %p137 = scmp.eq.s32.totalorder %s17, 1
    %p138 = por %p136, %p137
    %p140 = scmp.ne.s32.totalorder %s123, %s139
    %p141 = scmp.eq.s32.totalorder %s17, 0
    %p142 = por %p140, %p141
    %s143 = sadd.s32 %s18, %s19
    %s144 = sadd.s32 %s30, %s26
    %s145 = ssub.s32 %s143, %s144
    %p146 = scmp.eq.s32.totalorder %s145, 0
    %s148 = sadd.s32 %s147, 1
    %s149 = scalar_select %p146, %s147, %s148
    %p152 = pneg %p146
    %p153 = scmp.eq.s32.totalorder %s11, 1
    %p154 = por %p152, %p153
    %p155 = scmp.ne.s32.totalorder %s147, %s150
    %p156 = scmp.eq.s32.totalorder %s11, 0
    %p157 = por %p155, %p156
    %p158 = scmp.ne.s32.totalorder %s147, %s150
    %p159 = scmp.eq.s32.totalorder %s16, 1
    %p160 = por %p158, %p159
    %p161 = scmp.ne.s32.totalorder %s150, %s151
    %p162 = scmp.eq.s32.totalorder %s16, 0
    %p163 = por %p161, %p162
    %p164 = scmp.ne.s32.totalorder %s150, %s151
    %p165 = scmp.eq.s32.totalorder %s17, 1
    %p166 = por %p164, %p165
    %p168 = scmp.ne.s32.totalorder %s151, %s167
    %p169 = scmp.eq.s32.totalorder %s17, 0
    %p170 = por %p168, %p169
    %p171 = scmp.le.s32.totalorder 1, %s11
    %p172 = scmp.lt.s32.totalorder %s11, 3
    %p173 = pnand %p171, %p172
    %p174 = pneg %p173
    // Predicated region
    $region9: #{loce_loss_2d.2} parent=5 // pred_check
      _
    $region10: #{loce_loss_2d.2} parent=5 // pred_check_branch
      %176 = sbr.rel (%p173) target = $region12
    $region11: #{loce_loss_2d.2} parent=5 // pred_region
      %s177 = ssub.s32 %s11, 1
    $region12: #{loce_loss_2d.2} parent=5 // pred_fallthru
      _
    %p178 = scmp.lt.s32.totalorder %s11, 2
    // Predicated region
    $region13: #{loce_loss_2d.2} parent=5 // pred_check
      %p179 = pneg %p178
    $region14: #{loce_loss_2d.2} parent=5 // pred_check_branch
      %181 = sbr.rel (%p179) target = $region16
    $region15: #{loce_loss_2d.2} parent=5 // pred_region
      // Predicated region
      $region17: #{loce_loss_2d.2} parent=15 // pred_check
        %p182 = pneg %p45
      $region18: #{loce_loss_2d.2} parent=15 // pred_check_branch
        %184 = sbr.rel (%p182) target = $region20
      $region19: #{loce_loss_2d.2} parent=15 // pred_region
        %s185 = smul.u32 2, %s19
        %p186 = scmp.lt.s32.totalorder %s18, 1
        %s187 = scalar_select %p186, %s18, 1
        %p188 = scmp.lt.s32.totalorder %s185, 1
        %s189 = scalar_select %p188, %s185, 1
        %s190 = smul.addr %s187, 2
        %s191 = sadd.s32 %s189, %s190
        %s192 = smul.addr %s191, 4
        %s193 = scalar_lea.vmem %s0, %s192
        %s194 = smul.u32 2, %s19
      $region20: #{loce_loss_2d.2} parent=15 // pred_fallthru
        _
      // Predicated region
      $region21: #{loce_loss_2d.2} parent=15 // pred_check
        %p195 = pneg %p73
      $region22: #{loce_loss_2d.2} parent=15 // pred_check_branch
        %197 = sbr.rel (%p195) target = $region24
      $region23: #{loce_loss_2d.2} parent=15 // pred_region
        %s198 = smul.u32 2, %s19
        %p199 = scmp.lt.s32.totalorder %s18, 1
        %s200 = scalar_select %p199, %s18, 1
        %p201 = scmp.lt.s32.totalorder %s198, 1
        %s202 = scalar_select %p201, %s198, 1
        %s203 = smul.addr %s200, 2
        %s204 = sadd.s32 %s202, %s203
        %s205 = scalar_lea.vmem %s1, %s204
        %s206 = smul.u32 2, %s19
      $region24: #{loce_loss_2d.2} parent=15 // pred_fallthru
        _
    $region16: #{loce_loss_2d.2} parent=5 // pred_fallthru
      _
    %p207 = scmp.le.s32.totalorder 1, %s11
    %p208 = scmp.lt.s32.totalorder %s11, 3
    %p209 = pnand %p207, %p208
    %p210 = pneg %p209
    // Predicated region
    $region25: #{loce_loss_2d.2} parent=5 // pred_check
      _
    $region26: #{loce_loss_2d.2} parent=5 // pred_check_branch
      %212 = sbr.rel (%p209) target = $region28
    $region27: #{loce_loss_2d.2} parent=5 // pred_region
      %s213 = ssub.s32 %s11, 1
      %s214 = smul.u32 2, %s21
      %p215 = scmp.lt.s32.totalorder %s20, 1
      %s216 = scalar_select %p215, %s20, 1
      %p217 = scmp.lt.s32.totalorder %s214, 1
      %s218 = scalar_select %p217, %s214, 1
      %s219 = smul.addr %s216, 2
      %s220 = sadd.s32 %s218, %s219
      %s221 = smul.addr %s220, 4
      %s222 = scalar_lea.vmem %s0, %s221
      %p223 = pneg %p51
      %p224 = pneg %p48
      %s225 = smul.u32 2, %s21
      %p226 = scmp.lt.s32.totalorder %s20, 1
      %s227 = scalar_select %p226, %s20, 1
      %p228 = scmp.lt.s32.totalorder %s225, 1
      %s229 = scalar_select %p228, %s225, 1
      %s230 = smul.addr %s227, 2
      %s231 = sadd.s32 %s229, %s230
      %s232 = scalar_lea.vmem %s1, %s231
      %p233 = pneg %p79
      %p234 = pneg %p76
      %p235 = pneg %p107
      %p236 = pneg %p104
      %s237 = sadd.s32 %s20, %s21
      %s238 = smul.u32 2, %s237
      %p239 = scmp.lt.s32.totalorder %s238, 3
      %s240 = scalar_select %p239, %s238, 3
      %s241 = smul.addr %s240, 4
      %s242 = scalar_lea.vmem %s2, %s241
      %p243 = pneg %p135
      %p244 = pneg %p132
      %s245 = sadd.s32 %s20, %s21
      %p246 = scmp.lt.s32.totalorder %s245, 1
      %s247 = scalar_select %p246, %s245, 1
      %s248 = smul.addr %s247, 4
      %s249 = scalar_lea.vmem %s3, %s248
      %p250 = pneg %p163
      %p251 = pneg %p160
      %s252 = sadd.s32 %s20, %s21
      %p253 = scmp.lt.s32.totalorder %s252, 1
      %s254 = scalar_select %p253, %s252, 1
      %s255 = scalar_lea.vmem %s4, %s254
      %s256 = smul.u32 2, %s21
      %p257 = scmp.lt.s32.totalorder %s20, 1
      %s258 = scalar_select %p257, %s20, 1
      %p259 = scmp.lt.s32.totalorder %s256, 1
      %s260 = scalar_select %p259, %s256, 1
      %s261 = smul.addr %s258, 2
      %s262 = sadd.s32 %s260, %s261
      %s263 = smul.addr %s262, 4
      %s264 = scalar_lea.vmem %s0, %s263
      %s265 = smul.u32 2, %s21
      %s266 = smul.u32 2, %s21
      %p267 = scmp.lt.s32.totalorder %s20, 1
      %s268 = scalar_select %p267, %s20, 1
      %p269 = scmp.lt.s32.totalorder %s266, 1
      %s270 = scalar_select %p269, %s266, 1
      %s271 = smul.addr %s268, 2
      %s272 = sadd.s32 %s270, %s271
      %s273 = scalar_lea.vmem %s1, %s272
      %s274 = smul.u32 2, %s21
      %s275 = sadd.s32 %s20, %s21
      %s276 = smul.u32 2, %s275
      %p277 = scmp.lt.s32.totalorder %s276, 3
      %s278 = scalar_select %p277, %s276, 3
      %s279 = smul.addr %s278, 4
      %s280 = scalar_lea.vmem %s2, %s279
      %s281 = sadd.s32 %s20, %s21
      %s282 = smul.u32 2, %s281
      %s283 = sadd.s32 %s20, %s21
      %p284 = scmp.lt.s32.totalorder %s283, 1
      %s285 = scalar_select %p284, %s283, 1
      %s286 = smul.addr %s285, 4
      %s287 = scalar_lea.vmem %s3, %s286
      %s288 = sadd.s32 %s20, %s21
      %s289 = sadd.s32 %s20, %s21
      %p290 = scmp.lt.s32.totalorder %s289, 1
      %s291 = scalar_select %p290, %s289, 1
      %s292 = scalar_lea.vmem %s4, %s291
      %s293 = sadd.s32 %s20, %s21
      %v294 = vld [vmem:[%s264] sm:$0xff]
      %296 = vst [vmem:[#allocation1] ss:$2 sm:$0xff] %v294
      %v297 = vld.sshfl [vmem:[#allocation1] sm:$0xff pattern:$0x75316420]
      %v298 = vld.sshfl [vmem:[#allocation1 + $0x8] sm:$0xff pattern:$0x75316420]
      %vm301 = vcmask 1043456
      %v302 = vsel %vm301, %v297, -inf
      %v303 = vrot.slane %v302, 4
      %v304 = vmax.f32 %v302, %v303
      %v305 = vrot.slane %v304, 2
      %v306 = vmax.f32 %v304, %v305
      %v307 = vrot.slane %v306, 1
      %v308 = vmax.f32 %v306, %v307
      %v309 = vsel %vm301, %v298, -inf
      %v310 = vrot.slane %v309, 4
      %v311 = vmax.f32 %v309, %v310
      %v312 = vrot.slane %v311, 2
      %v313 = vmax.f32 %v311, %v312
      %v314 = vrot.slane %v313, 1
      %v315 = vmax.f32 %v313, %v314
      %v318 = vrot.slane %v315, 4
      %v319 = vsel %vm301, %v308, %v318
      %v321 = vsub.f32 %v294, %v319
      %v322 = vmul.f32 %v321, 1.442695
      %v323 = vpow.pop %v322
      %325 = vst [vmem:[#allocation1] ss:$2 sm:$0xff] %v323
      %v326 = vld.sshfl [vmem:[#allocation1] sm:$0xff pattern:$0x75316420]
      %v327 = vld.sshfl [vmem:[#allocation1 + $0x8] sm:$0xff pattern:$0x75316420]
      %v330 = vsel %vm301, %v326, 0.0
      %v331 = vrot.slane %v330, 4
      %v332 = vadd.f32 %v330, %v331
      %v333 = vrot.slane %v332, 2
      %v334 = vadd.f32 %v332, %v333
      %v335 = vrot.slane %v334, 1
      %v336 = vadd.f32 %v334, %v335
      %v337 = vsel %vm301, %v327, 0.0
      %v338 = vrot.slane %v337, 4
      %v339 = vadd.f32 %v337, %v338
      %v340 = vrot.slane %v339, 2
      %v341 = vadd.f32 %v339, %v340
      %v342 = vrot.slane %v341, 1
      %v343 = vadd.f32 %v341, %v342
      %v346 = vrot.slane %v343, 4
      %v347 = vsel %vm301, %v336, %v346
      %v349 = vrcp.pop %v347
      %v350 = vmul.f32 %v347, %v349
      %v351 = vsub.f32 1.0, %v350
      %v352 = vmul.f32 %v349, %v351
      %v353 = vadd.f32 %v349, %v352
      %vm354 = vweird.f32 %v347
      %vm355 = vweird.f32 %v349
      %vm356 = vmor %vm354, %vm355
      %v357 = vsel %vm356, %v349, %v353
      %v358 = vand.u32 2147483647, %v347
      %vm359 = vcmp.eq.f32.partialorder %v358, 8.507059e+37
      %v360 = vand.u32 %v347, 2147483648
      %v361 = vor.u32 1.1754944e-38, %v360
      %v362 = vsel %vm359, %v361, %v357
      %v363 = vmul.f32 %v323, %v362
      %v364 = vlog2.pop %v336
      %v365 = vmul.f32 %v364, 0.6931472
      %v366 = vlog2.pop %v343
      %v367 = vmul.f32 %v366, 0.6931472
      %v370 = vrot.slane %v367, 4
      %v371 = vsel %vm301, %v365, %v370
      %v373 = vsub.f32 %v321, %v371
      %v374 = vlaneseq
      %v375 = vshrl.u32 %v374, 7
      %v376 = vld [vmem:[%s273] sm:$0x3]
      %v377 = vperm.slane %v376, 0
      %v378 = vperm.slane %v376, 1
      %vm379 = vcmp.eq.s32.totalorder %v375, %v377
      %vm380 = vcmp.eq.s32.totalorder %v375, %v378
      %v381 = vsel %vm379, 1, 0
      %v382 = vsel %vm380, 1, 0
      %v383 = vcvt.s32.f32 %v381
      %v384 = vcvt.s32.f32 %v382
      %386 = vst [vmem:[#allocation1] ss:$2 sm:$0xff] %v363
      %v387 = vld.sshfl [vmem:[#allocation1] sm:$0xff pattern:$0x75316420]
      %v388 = vld.sshfl [vmem:[#allocation1 + $0x8] sm:$0xff pattern:$0x75316420]
      %v391 = vsub.f32 %v383, %v387
      %v392 = vsub.f32 %v384, %v388
      %v393 = vand.u32 2147483647, %v391
      %v394 = vand.u32 2147483647, %v392
      %v397 = vand.u32 %v393, 4294967294
      %v398 = vand.u32 %v394, 4294967294
      %v399 = vor.u32 %v397, %v381
      %v400 = vor.u32 %v398, %v382
      %v401 = vsub.s32 0, %v399
      %v402 = vsub.s32 0, %v400
      %v403 = vrot.slane %v402, 4
      %v404 = vsel %vm301, %v401, %v403
      %405 = vst [vmem:[%s280] sm:$0xff] %v404
      %v406 = vsel %vm301, %v383, 0.0
      %v407 = vsel %vm301, %v384, 0.0
      %v408 = vadd.f32 %v406, %v407
      %409 = vadd.xlane.f32.xlu0 %v408
      %v410 = vpop.xlane.xlu0 %409
      %412 = vst [vmem:[#allocation1] ss:$2 sm:$0xff] %v373
      %v413 = vld.sshfl [vmem:[#allocation1] sm:$0xff pattern:$0x75316420]
      %v414 = vld.sshfl [vmem:[#allocation1 + $0x8] sm:$0xff pattern:$0x75316420]
      %v417 = vmul.f32 %v383, %v413
      %v418 = vmul.f32 %v384, %v414
      %v419 = vsel %vm301, %v417, 0.0
      %v420 = vsel %vm301, %v418, 0.0
      %v421 = vadd.f32 %v419, %v420
      %422 = vadd.xlane.f32.xlu0 %v421
      %v423 = vpop.xlane.xlu0 %422
      %v424 = vsel %vm301, %v423, 0.0
      %v425 = vrot.slane %v424, 4
      %v426 = vadd.f32 %v424, %v425
      %v427 = vrot.slane %v426, 2
      %v428 = vadd.f32 %v426, %v427
      %v429 = vrot.slane %v428, 1
      %v430 = vadd.f32 %v428, %v429
      %v431 = vlaneseq
      %v432 = vand.u32 %v431, 127
      %vm433 = vcmp.eq.s32.totalorder %v432, 0
      %v434 = vsel %vm433, %v410, 0.0
      %435 = vst [vmem:[%s287] sm:$0xf] %v434
      %v436 = vsel %vm433, %v430, 0.0
      %437 = vst [vmem:[%s292] sm:$0x1] %v436
      %s438 = sadd.s32 %s20, %s21
      %s439 = smul.u32 2, %s438
      %p440 = scmp.lt.s32.totalorder %s439, 3
      %s441 = scalar_select %p440, %s439, 3
      %s442 = smul.addr %s441, 4
      %s443 = scalar_lea.vmem %s2, %s442
      %s444 = sadd.s32 %s20, %s21
      %p445 = scmp.lt.s32.totalorder %s444, 1
      %s446 = scalar_select %p445, %s444, 1
      %s447 = smul.addr %s446, 4
      %s448 = scalar_lea.vmem %s3, %s447
      %s449 = sadd.s32 %s20, %s21
      %p450 = scmp.lt.s32.totalorder %s449, 1
      %s451 = scalar_select %p450, %s449, 1
      %s452 = scalar_lea.vmem %s4, %s451
      // Predicated region
      $region29: #{loce_loss_2d.2} parent=27 // pred_check
        %p453 = pneg %p104
      $region30: #{loce_loss_2d.2} parent=27 // pred_check_branch
        %455 = sbr.rel (%p453) target = $region32
      $region31: #{loce_loss_2d.2} parent=27 // pred_region
        %s456 = sadd.s32 %s20, %s21
        %s457 = smul.u32 2, %s456
      $region32: #{loce_loss_2d.2} parent=27 // pred_fallthru
        _
      // Predicated region
      $region33: #{loce_loss_2d.2} parent=27 // pred_check
        %p458 = pneg %p132
      $region34: #{loce_loss_2d.2} parent=27 // pred_check_branch
        %460 = sbr.rel (%p458) target = $region36
      $region35: #{loce_loss_2d.2} parent=27 // pred_region
        %s461 = sadd.s32 %s20, %s21
      $region36: #{loce_loss_2d.2} parent=27 // pred_fallthru
        _
      // Predicated region
      $region37: #{loce_loss_2d.2} parent=27 // pred_check
        %p462 = pneg %p160
      $region38: #{loce_loss_2d.2} parent=27 // pred_check_branch
        %464 = sbr.rel (%p462) target = $region40
      $region39: #{loce_loss_2d.2} parent=27 // pred_region
        %s465 = sadd.s32 %s20, %s21
      $region40: #{loce_loss_2d.2} parent=27 // pred_fallthru
        _
    $region28: #{loce_loss_2d.2} parent=5 // pred_fallthru
      _
    %p466 = scmp.le.s32.totalorder 2, %s11
    // Predicated region
    $region41: #{loce_loss_2d.2} parent=5 // pred_check
      %p467 = pneg %p466
    $region42: #{loce_loss_2d.2} parent=5 // pred_check_branch
      %469 = sbr.rel (%p467) target = $region44
    $region43: #{loce_loss_2d.2} parent=5 // pred_region
      %s470 = ssub.s32 %s11, 2
      // Predicated region
      $region45: #{loce_loss_2d.2} parent=43 // pred_check
        %p471 = pneg %p110
      $region46: #{loce_loss_2d.2} parent=43 // pred_check_branch
        %473 = sbr.rel (%p471) target = $region48
      $region47: #{loce_loss_2d.2} parent=43 // pred_region
        %s474 = sadd.s32 %s22, %s23
        %s475 = smul.u32 2, %s474
        %p476 = scmp.lt.s32.totalorder %s475, 3
        %s477 = scalar_select %p476, %s475, 3
        %s478 = smul.addr %s477, 4
        %s479 = scalar_lea.vmem %s2, %s478
      $region48: #{loce_loss_2d.2} parent=43 // pred_fallthru
        _
      // Predicated region
      $region49: #{loce_loss_2d.2} parent=43 // pred_check
        %p480 = pneg %p138
      $region50: #{loce_loss_2d.2} parent=43 // pred_check_branch
        %482 = sbr.rel (%p480) target = $region52
      $region51: #{loce_loss_2d.2} parent=43 // pred_region
        %s483 = sadd.s32 %s22, %s23
        %p484 = scmp.lt.s32.totalorder %s483, 1
        %s485 = scalar_select %p484, %s483, 1
        %s486 = smul.addr %s485, 4
        %s487 = scalar_lea.vmem %s3, %s486
      $region52: #{loce_loss_2d.2} parent=43 // pred_fallthru
        _
      // Predicated region
      $region53: #{loce_loss_2d.2} parent=43 // pred_check
        %p488 = pneg %p166
      $region54: #{loce_loss_2d.2} parent=43 // pred_check_branch
        %490 = sbr.rel (%p488) target = $region56
      $region55: #{loce_loss_2d.2} parent=43 // pred_region
        %s491 = sadd.s32 %s22, %s23
        %p492 = scmp.lt.s32.totalorder %s491, 1
        %s493 = scalar_select %p492, %s491, 1
        %s494 = scalar_lea.vmem %s4, %s493
      $region56: #{loce_loss_2d.2} parent=43 // pred_fallthru
        _
    $region44: #{loce_loss_2d.2} parent=5 // pred_fallthru
      _
  $region6: #{loce_loss_2d.2} parent=0 // loop_footer
    %s15 = sadd.s32 1, %s11
  $region7: #{loce_loss_2d.2} parent=0 // loop_footer_branch
    %10 = sbr.rel target = $region3
  $region8: #{loce_loss_2d.2} parent=0 // loop_exit
    _

// kernel: loce_loss_2d.3
$region0: #{loce_loss_2d.3}
  #allocation0 [shape = 'u32[]', space=smem, size = 0x4, offset = 0x4, fixed_abs, tag = 'smem constant byte address 0x4 - core index']
  #allocation1 [shape = 'u32[72,128]{1,0:T(1,128)}', space=vmem, size = 0x9000, scoped, tag = 'internal scratch']
  #allocation2 [shape = 'bf16[512,512]{1,0:T(8,128)(2,1)}', space=vmem, size = 0x80000, scoped, tag = 'scratch operand']
  #allocation3 [shape = 'f32[4,1]{1,0:T(4,128)}', space=vmem, size = 0x800, scoped, tag = 'scratch operand']
  %s0 = inlined_call_operand.vmem [shape: s32[4,512], index: 0, kind: input, shape index: {}]
  %s1 = inlined_call_operand.vmem [shape: f32[4,1], index: 1, kind: input, shape index: {}]
  %s2 = inlined_call_operand.hbm [shape: f32[1,1], index: 2, kind: output, shape index: {}]
  %s3 = sld [smem:[#allocation0]]
  $region22: #{loce_loss_2d.3} parent=0
    _
  %s5 = ssub.s32 1, %s3
  %s6 = scalar_select 0, %s5, %s3
  $region1: #{loce_loss_2d.3} parent=0
    #allocation4 [shape = 'u8[512]{0}', space=vmem, size = 0x400, scoped, tag = 'output window, operand 0, single buffered']
    #allocation5 [shape = 's32[1]{0}', space=sflag, size = 0x4, scoped, tag = 'scoped memory for loce_loss_2d.3']
    %7 = vsyncpa [#allocation5], 0
    // Predicated region
    $region2: #{loce_loss_2d.3} parent=1 // pred_check
      _
    $region3: #{loce_loss_2d.3} parent=1 // pred_check_branch
      %9 = sbr.rel (0) target = $region5
    $region4: #{loce_loss_2d.3} parent=1 // pred_region
      _
    $region5: #{loce_loss_2d.3} parent=1 // pred_fallthru
      _
    // Predicated region
    $region6: #{loce_loss_2d.3} parent=1 // pred_check
      _
    $region7: #{loce_loss_2d.3} parent=1 // pred_check_branch
      %11 = sbr.rel (0) target = $region9
    $region8: #{loce_loss_2d.3} parent=1 // pred_region
      _
    $region9: #{loce_loss_2d.3} parent=1 // pred_fallthru
      _
    %p12 = scmp.eq.s32.totalorder 0, 0
    // Predicated region
    $region10: #{loce_loss_2d.3} parent=1 // pred_check
      %p13 = pneg %p12
    $region11: #{loce_loss_2d.3} parent=1 // pred_check_branch
      %15 = sbr.rel (%p13) target = $region13
    $region12: #{loce_loss_2d.3} parent=1 // pred_region
      %vm16 = vcmask 0
      %17 = vst.msk [vmem:[#allocation4] sm:$0x1] %vm16, 0.0
      %vm18 = vcmask 3072
      %19 = vst.msk [vmem:[#allocation3] sm:$0xf] %vm18, 0.0
      %v20 = vlaneseq
      %v21 = vshrl.u32 %v20, 7
      %v22 = vadd.s32 %v21, 8
      %v23 = vadd.s32 %v21, 16
      %v24 = vadd.s32 %v21, 24
      %v25 = vadd.s32 %v21, 32
      %v26 = vadd.s32 %v21, 40
      %v27 = vadd.s32 %v21, 48
      %v28 = vadd.s32 %v21, 56
      %v29 = vadd.s32 %v21, 64
      %v30 = vadd.s32 %v21, 72
      %v31 = vadd.s32 %v21, 80
      %v32 = vadd.s32 %v21, 88
      %v33 = vadd.s32 %v21, 96
      %v34 = vadd.s32 %v21, 104
      %v35 = vadd.s32 %v21, 112
      %v36 = vadd.s32 %v21, 120
      %v37 = vadd.s32 %v21, 128
      %v38 = vadd.s32 %v21, 136
      %v39 = vadd.s32 %v21, 144
      %v40 = vadd.s32 %v21, 152
      %v41 = vadd.s32 %v21, 160
      %v42 = vadd.s32 %v21, 168
      %v43 = vadd.s32 %v21, 176
      %v44 = vadd.s32 %v21, 184
      %v45 = vadd.s32 %v21, 192
      %v46 = vadd.s32 %v21, 200
      %v47 = vadd.s32 %v21, 208
      %v48 = vadd.s32 %v21, 216
      %v49 = vadd.s32 %v21, 224
      %v50 = vadd.s32 %v21, 232
      %v51 = vadd.s32 %v21, 240
      %v52 = vadd.s32 %v21, 248
      %v53 = vadd.s32 %v21, 256
      %v54 = vadd.s32 %v21, 264
      %v55 = vadd.s32 %v21, 272
      %v56 = vadd.s32 %v21, 280
      %v57 = vadd.s32 %v21, 288
      %v58 = vadd.s32 %v21, 296
      %v59 = vadd.s32 %v21, 304
      %v60 = vadd.s32 %v21, 312
      %v61 = vadd.s32 %v21, 320
      %v62 = vadd.s32 %v21, 328
      %v63 = vadd.s32 %v21, 336
      %v64 = vadd.s32 %v21, 344
      %v65 = vadd.s32 %v21, 352
      %v66 = vadd.s32 %v21, 360
      %v67 = vadd.s32 %v21, 368
      %v68 = vadd.s32 %v21, 376
      %v69 = vadd.s32 %v21, 384
      %v70 = vadd.s32 %v21, 392
      %v71 = vadd.s32 %v21, 400
      %v72 = vadd.s32 %v21, 408
      %v73 = vadd.s32 %v21, 416
      %v74 = vadd.s32 %v21, 424
      %v75 = vadd.s32 %v21, 432
      %v76 = vadd.s32 %v21, 440
      %v77 = vadd.s32 %v21, 448
      %v78 = vadd.s32 %v21, 456
      %v79 = vadd.s32 %v21, 464
      %v80 = vadd.s32 %v21, 472
      %v81 = vadd.s32 %v21, 480
      %v82 = vadd.s32 %v21, 488
      %v83 = vadd.s32 %v21, 496
      %v84 = vadd.s32 %v21, 504
      %v85 = vlaneseq
      %v86 = vand.u32 %v85, 127
      %v87 = vadd.s32 %v86, 128
      %v88 = vadd.s32 %v86, 256
      %v89 = vadd.s32 %v86, 384
      %vm90 = vcmp.le.s32.totalorder %v21, %v86
      %vm91 = vcmp.le.s32.totalorder %v21, %v87
      %vm92 = vcmp.le.s32.totalorder %v21, %v88
      %vm93 = vcmp.le.s32.totalorder %v21, %v89
      %vm94 = vcmp.le.s32.totalorder %v22, %v86
      %vm95 = vcmp.le.s32.totalorder %v22, %v87
      %vm96 = vcmp.le.s32.totalorder %v22, %v88
      %vm97 = vcmp.le.s32.totalorder %v22, %v89
      %vm98 = vcmp.le.s32.totalorder %v23, %v86
      %vm99 = vcmp.le.s32.totalorder %v23, %v87
      %vm100 = vcmp.le.s32.totalorder %v23, %v88
      %vm101 = vcmp.le.s32.totalorder %v23, %v89
      %vm102 = vcmp.le.s32.totalorder %v24, %v86
      %vm103 = vcmp.le.s32.totalorder %v24, %v87
      %vm104 = vcmp.le.s32.totalorder %v24, %v88
      %vm105 = vcmp.le.s32.totalorder %v24, %v89
      %vm106 = vcmp.le.s32.totalorder %v25, %v86
      %vm107 = vcmp.le.s32.totalorder %v25, %v87
      %vm108 = vcmp.le.s32.totalorder %v25, %v88
      %vm109 = vcmp.le.s32.totalorder %v25, %v89
      %vm110 = vcmp.le.s32.totalorder %v26, %v86
      %vm111 = vcmp.le.s32.totalorder %v26, %v87
      %vm112 = vcmp.le.s32.totalorder %v26, %v88
      %vm113 = vcmp.le.s32.totalorder %v26, %v89
      %vm114 = vcmp.le.s32.totalorder %v27, %v86
      %vm115 = vcmp.le.s32.totalorder %v27, %v87
      %vm116 = vcmp.le.s32.totalorder %v27, %v88
      %vm117 = vcmp.le.s32.totalorder %v27, %v89
      %vm118 = vcmp.le.s32.totalorder %v28, %v86
      %vm119 = vcmp.le.s32.totalorder %v28, %v87
      %vm120 = vcmp.le.s32.totalorder %v28, %v88
      %vm121 = vcmp.le.s32.totalorder %v28, %v89
      %vm122 = vcmp.le.s32.totalorder %v29, %v86
      %vm123 = vcmp.le.s32.totalorder %v29, %v87
      %vm124 = vcmp.le.s32.totalorder %v29, %v88
      %vm125 = vcmp.le.s32.totalorder %v29, %v89
      %vm126 = vcmp.le.s32.totalorder %v30, %v86
      %vm127 = vcmp.le.s32.totalorder %v30, %v87
      %vm128 = vcmp.le.s32.totalorder %v30, %v88
      %vm129 = vcmp.le.s32.totalorder %v30, %v89
      %vm130 = vcmp.le.s32.totalorder %v31, %v86
      %vm131 = vcmp.le.s32.totalorder %v31, %v87
      %vm132 = vcmp.le.s32.totalorder %v31, %v88
      %vm133 = vcmp.le.s32.totalorder %v31, %v89
      %vm134 = vcmp.le.s32.totalorder %v32, %v86
      %vm135 = vcmp.le.s32.totalorder %v32, %v87
      %vm136 = vcmp.le.s32.totalorder %v32, %v88
      %vm137 = vcmp.le.s32.totalorder %v32, %v89
      %vm138 = vcmp.le.s32.totalorder %v33, %v86
      %vm139 = vcmp.le.s32.totalorder %v33, %v87
      %vm140 = vcmp.le.s32.totalorder %v33, %v88
      %vm141 = vcmp.le.s32.totalorder %v33, %v89
      %vm142 = vcmp.le.s32.totalorder %v34, %v86
      %vm143 = vcmp.le.s32.totalorder %v34, %v87
      %vm144 = vcmp.le.s32.totalorder %v34, %v88
      %vm145 = vcmp.le.s32.totalorder %v34, %v89
      %vm146 = vcmp.le.s32.totalorder %v35, %v86
      %vm147 = vcmp.le.s32.totalorder %v35, %v87
      %vm148 = vcmp.le.s32.totalorder %v35, %v88
      %vm149 = vcmp.le.s32.totalorder %v35, %v89
      %vm150 = vcmp.le.s32.totalorder %v36, %v86
      %vm151 = vcmp.le.s32.totalorder %v36, %v87
      %vm152 = vcmp.le.s32.totalorder %v36, %v88
      %vm153 = vcmp.le.s32.totalorder %v36, %v89
      %vm154 = vcmp.le.s32.totalorder %v37, %v86
      %vm155 = vcmp.le.s32.totalorder %v37, %v87
      %vm156 = vcmp.le.s32.totalorder %v37, %v88
      %vm157 = vcmp.le.s32.totalorder %v37, %v89
      %vm158 = vcmp.le.s32.totalorder %v38, %v86
      %vm159 = vcmp.le.s32.totalorder %v38, %v87
      %vm160 = vcmp.le.s32.totalorder %v38, %v88
      %vm161 = vcmp.le.s32.totalorder %v38, %v89
      %vm162 = vcmp.le.s32.totalorder %v39, %v86
      %vm163 = vcmp.le.s32.totalorder %v39, %v87
      %vm164 = vcmp.le.s32.totalorder %v39, %v88
      %vm165 = vcmp.le.s32.totalorder %v39, %v89
      %vm166 = vcmp.le.s32.totalorder %v40, %v86
      %vm167 = vcmp.le.s32.totalorder %v40, %v87
      %vm168 = vcmp.le.s32.totalorder %v40, %v88
      %vm169 = vcmp.le.s32.totalorder %v40, %v89
      %vm170 = vcmp.le.s32.totalorder %v41, %v86
      %vm171 = vcmp.le.s32.totalorder %v41, %v87
      %vm172 = vcmp.le.s32.totalorder %v41, %v88
      %vm173 = vcmp.le.s32.totalorder %v41, %v89
      %vm174 = vcmp.le.s32.totalorder %v42, %v86
      %vm175 = vcmp.le.s32.totalorder %v42, %v87
      %vm176 = vcmp.le.s32.totalorder %v42, %v88
      %vm177 = vcmp.le.s32.totalorder %v42, %v89
      %vm178 = vcmp.le.s32.totalorder %v43, %v86
      %vm179 = vcmp.le.s32.totalorder %v43, %v87
      %vm180 = vcmp.le.s32.totalorder %v43, %v88
      %vm181 = vcmp.le.s32.totalorder %v43, %v89
      %vm182 = vcmp.le.s32.totalorder %v44, %v86
      %vm183 = vcmp.le.s32.totalorder %v44, %v87
      %vm184 = vcmp.le.s32.totalorder %v44, %v88
      %vm185 = vcmp.le.s32.totalorder %v44, %v89
      %vm186 = vcmp.le.s32.totalorder %v45, %v86
      %vm187 = vcmp.le.s32.totalorder %v45, %v87
      %vm188 = vcmp.le.s32.totalorder %v45, %v88
      %vm189 = vcmp.le.s32.totalorder %v45, %v89
      %vm190 = vcmp.le.s32.totalorder %v46, %v86
      %vm191 = vcmp.le.s32.totalorder %v46, %v87
      %vm192 = vcmp.le.s32.totalorder %v46, %v88
      %vm193 = vcmp.le.s32.totalorder %v46, %v89
      %vm194 = vcmp.le.s32.totalorder %v47, %v86
      %vm195 = vcmp.le.s32.totalorder %v47, %v87
      %vm196 = vcmp.le.s32.totalorder %v47, %v88
      %vm197 = vcmp.le.s32.totalorder %v47, %v89
      %vm198 = vcmp.le.s32.totalorder %v48, %v86
      %vm199 = vcmp.le.s32.totalorder %v48, %v87
      %vm200 = vcmp.le.s32.totalorder %v48, %v88
      %vm201 = vcmp.le.s32.totalorder %v48, %v89
      %vm202 = vcmp.le.s32.totalorder %v49, %v86
      %vm203 = vcmp.le.s32.totalorder %v49, %v87
      %vm204 = vcmp.le.s32.totalorder %v49, %v88
      %vm205 = vcmp.le.s32.totalorder %v49, %v89
      %vm206 = vcmp.le.s32.totalorder %v50, %v86
      %vm207 = vcmp.le.s32.totalorder %v50, %v87
      %vm208 = vcmp.le.s32.totalorder %v50, %v88
      %vm209 = vcmp.le.s32.totalorder %v50, %v89
      %vm210 = vcmp.le.s32.totalorder %v51, %v86
      %vm211 = vcmp.le.s32.totalorder %v51, %v87
      %vm212 = vcmp.le.s32.totalorder %v51, %v88
      %vm213 = vcmp.le.s32.totalorder %v51, %v89
      %vm214 = vcmp.le.s32.totalorder %v52, %v86
      %vm215 = vcmp.le.s32.totalorder %v52, %v87
      %vm216 = vcmp.le.s32.totalorder %v52, %v88
      %vm217 = vcmp.le.s32.totalorder %v52, %v89
      %vm218 = vcmp.le.s32.totalorder %v53, %v86
      %vm219 = vcmp.le.s32.totalorder %v53, %v87
      %vm220 = vcmp.le.s32.totalorder %v53, %v88
      %vm221 = vcmp.le.s32.totalorder %v53, %v89
      %vm222 = vcmp.le.s32.totalorder %v54, %v86
      %vm223 = vcmp.le.s32.totalorder %v54, %v87
      %vm224 = vcmp.le.s32.totalorder %v54, %v88
      %vm225 = vcmp.le.s32.totalorder %v54, %v89
      %vm226 = vcmp.le.s32.totalorder %v55, %v86
      %vm227 = vcmp.le.s32.totalorder %v55, %v87
      %vm228 = vcmp.le.s32.totalorder %v55, %v88
      %vm229 = vcmp.le.s32.totalorder %v55, %v89
      %vm230 = vcmp.le.s32.totalorder %v56, %v86
      %vm231 = vcmp.le.s32.totalorder %v56, %v87
      %vm232 = vcmp.le.s32.totalorder %v56, %v88
      %vm233 = vcmp.le.s32.totalorder %v56, %v89
      %vm234 = vcmp.le.s32.totalorder %v57, %v86
      %vm235 = vcmp.le.s32.totalorder %v57, %v87
      %vm236 = vcmp.le.s32.totalorder %v57, %v88
      %vm237 = vcmp.le.s32.totalorder %v57, %v89
      %vm238 = vcmp.le.s32.totalorder %v58, %v86
      %vm239 = vcmp.le.s32.totalorder %v58, %v87
      %vm240 = vcmp.le.s32.totalorder %v58, %v88
      %vm241 = vcmp.le.s32.totalorder %v58, %v89
      %vm242 = vcmp.le.s32.totalorder %v59, %v86
      %vm243 = vcmp.le.s32.totalorder %v59, %v87
      %vm244 = vcmp.le.s32.totalorder %v59, %v88
      %vm245 = vcmp.le.s32.totalorder %v59, %v89
      %vm246 = vcmp.le.s32.totalorder %v60, %v86
      %vm247 = vcmp.le.s32.totalorder %v60, %v87
      %vm248 = vcmp.le.s32.totalorder %v60, %v88
      %vm249 = vcmp.le.s32.totalorder %v60, %v89
      %vm250 = vcmp.le.s32.totalorder %v61, %v86
      %vm251 = vcmp.le.s32.totalorder %v61, %v87
      %vm252 = vcmp.le.s32.totalorder %v61, %v88
      %vm253 = vcmp.le.s32.totalorder %v61, %v89
      %vm254 = vcmp.le.s32.totalorder %v62, %v86
      %vm255 = vcmp.le.s32.totalorder %v62, %v87
      %vm256 = vcmp.le.s32.totalorder %v62, %v88
      %vm257 = vcmp.le.s32.totalorder %v62, %v89
      %vm258 = vcmp.le.s32.totalorder %v63, %v86
      %vm259 = vcmp.le.s32.totalorder %v63, %v87
      %vm260 = vcmp.le.s32.totalorder %v63, %v88
      %vm261 = vcmp.le.s32.totalorder %v63, %v89
      %vm262 = vcmp.le.s32.totalorder %v64, %v86
      %vm263 = vcmp.le.s32.totalorder %v64, %v87
      %vm264 = vcmp.le.s32.totalorder %v64, %v88
      %vm265 = vcmp.le.s32.totalorder %v64, %v89
      %vm266 = vcmp.le.s32.totalorder %v65, %v86
      %vm267 = vcmp.le.s32.totalorder %v65, %v87
      %vm268 = vcmp.le.s32.totalorder %v65, %v88
      %vm269 = vcmp.le.s32.totalorder %v65, %v89
      %vm270 = vcmp.le.s32.totalorder %v66, %v86
      %vm271 = vcmp.le.s32.totalorder %v66, %v87
      %vm272 = vcmp.le.s32.totalorder %v66, %v88
      %vm273 = vcmp.le.s32.totalorder %v66, %v89
      %vm274 = vcmp.le.s32.totalorder %v67, %v86
      %vm275 = vcmp.le.s32.totalorder %v67, %v87
      %vm276 = vcmp.le.s32.totalorder %v67, %v88
      %vm277 = vcmp.le.s32.totalorder %v67, %v89
      %vm278 = vcmp.le.s32.totalorder %v68, %v86
      %vm279 = vcmp.le.s32.totalorder %v68, %v87
      %vm280 = vcmp.le.s32.totalorder %v68, %v88
      %vm281 = vcmp.le.s32.totalorder %v68, %v89
      %vm282 = vcmp.le.s32.totalorder %v69, %v86
      %vm283 = vcmp.le.s32.totalorder %v69, %v87
      %vm284 = vcmp.le.s32.totalorder %v69, %v88
      %vm285 = vcmp.le.s32.totalorder %v69, %v89
      %vm286 = vcmp.le.s32.totalorder %v70, %v86
      %vm287 = vcmp.le.s32.totalorder %v70, %v87
      %vm288 = vcmp.le.s32.totalorder %v70, %v88
      %vm289 = vcmp.le.s32.totalorder %v70, %v89
      %vm290 = vcmp.le.s32.totalorder %v71, %v86
      %vm291 = vcmp.le.s32.totalorder %v71, %v87
      %vm292 = vcmp.le.s32.totalorder %v71, %v88
      %vm293 = vcmp.le.s32.totalorder %v71, %v89
      %vm294 = vcmp.le.s32.totalorder %v72, %v86
      %vm295 = vcmp.le.s32.totalorder %v72, %v87
      %vm296 = vcmp.le.s32.totalorder %v72, %v88
      %vm297 = vcmp.le.s32.totalorder %v72, %v89
      %vm298 = vcmp.le.s32.totalorder %v73, %v86
      %vm299 = vcmp.le.s32.totalorder %v73, %v87
      %vm300 = vcmp.le.s32.totalorder %v73, %v88
      %vm301 = vcmp.le.s32.totalorder %v73, %v89
      %vm302 = vcmp.le.s32.totalorder %v74, %v86
      %vm303 = vcmp.le.s32.totalorder %v74, %v87
      %vm304 = vcmp.le.s32.totalorder %v74, %v88
      %vm305 = vcmp.le.s32.totalorder %v74, %v89
      %vm306 = vcmp.le.s32.totalorder %v75, %v86
      %vm307 = vcmp.le.s32.totalorder %v75, %v87
      %vm308 = vcmp.le.s32.totalorder %v75, %v88
      %vm309 = vcmp.le.s32.totalorder %v75, %v89
      %vm310 = vcmp.le.s32.totalorder %v76, %v86
      %vm311 = vcmp.le.s32.totalorder %v76, %v87
      %vm312 = vcmp.le.s32.totalorder %v76, %v88
      %vm313 = vcmp.le.s32.totalorder %v76, %v89
      %vm314 = vcmp.le.s32.totalorder %v77, %v86
      %vm315 = vcmp.le.s32.totalorder %v77, %v87
      %vm316 = vcmp.le.s32.totalorder %v77, %v88
      %vm317 = vcmp.le.s32.totalorder %v77, %v89
      %vm318 = vcmp.le.s32.totalorder %v78, %v86
      %vm319 = vcmp.le.s32.totalorder %v78, %v87
      %vm320 = vcmp.le.s32.totalorder %v78, %v88
      %vm321 = vcmp.le.s32.totalorder %v78, %v89
      %vm322 = vcmp.le.s32.totalorder %v79, %v86
      %vm323 = vcmp.le.s32.totalorder %v79, %v87
      %vm324 = vcmp.le.s32.totalorder %v79, %v88
      %vm325 = vcmp.le.s32.totalorder %v79, %v89
      %vm326 = vcmp.le.s32.totalorder %v80, %v86
      %vm327 = vcmp.le.s32.totalorder %v80, %v87
      %vm328 = vcmp.le.s32.totalorder %v80, %v88
      %vm329 = vcmp.le.s32.totalorder %v80, %v89
      %vm330 = vcmp.le.s32.totalorder %v81, %v86
      %vm331 = vcmp.le.s32.totalorder %v81, %v87
      %vm332 = vcmp.le.s32.totalorder %v81, %v88
      %vm333 = vcmp.le.s32.totalorder %v81, %v89
      %vm334 = vcmp.le.s32.totalorder %v82, %v86
      %vm335 = vcmp.le.s32.totalorder %v82, %v87
      %vm336 = vcmp.le.s32.totalorder %v82, %v88
      %vm337 = vcmp.le.s32.totalorder %v82, %v89
      %vm338 = vcmp.le.s32.totalorder %v83, %v86
      %vm339 = vcmp.le.s32.totalorder %v83, %v87
      %vm340 = vcmp.le.s32.totalorder %v83, %v88
      %vm341 = vcmp.le.s32.totalorder %v83, %v89
      %vm342 = vcmp.le.s32.totalorder %v84, %v86
      %vm343 = vcmp.le.s32.totalorder %v84, %v87
      %vm344 = vcmp.le.s32.totalorder %v84, %v88
      %vm345 = vcmp.le.s32.totalorder %v84, %v89
      %v346 = vsel %vm90, 1, 0
      %v347 = vsel %vm91, 1, 0
      %v348 = vsel %vm92, 1, 0
      %v349 = vsel %vm93, 1, 0
      %v350 = vsel %vm94, 1, 0
      %v351 = vsel %vm95, 1, 0
      %v352 = vsel %vm96, 1, 0
      %v353 = vsel %vm97, 1, 0
      %v354 = vsel %vm98, 1, 0
      %v355 = vsel %vm99, 1, 0
      %v356 = vsel %vm100, 1, 0
      %v357 = vsel %vm101, 1, 0
      %v358 = vsel %vm102, 1, 0
      %v359 = vsel %vm103, 1, 0
      %v360 = vsel %vm104, 1, 0
      %v361 = vsel %vm105, 1, 0
      %v362 = vsel %vm106, 1, 0
      %v363 = vsel %vm107, 1, 0
      %v364 = vsel %vm108, 1, 0
      %v365 = vsel %vm109, 1, 0
      %v366 = vsel %vm110, 1, 0
      %v367 = vsel %vm111, 1, 0
      %v368 = vsel %vm112, 1, 0
      %v369 = vsel %vm113, 1, 0
      %v370 = vsel %vm114, 1, 0
      %v371 = vsel %vm115, 1, 0
      %v372 = vsel %vm116, 1, 0
      %v373 = vsel %vm117, 1, 0
      %v374 = vsel %vm118, 1, 0
      %v375 = vsel %vm119, 1, 0
      %v376 = vsel %vm120, 1, 0
      %v377 = vsel %vm121, 1, 0
      %v378 = vsel %vm122, 1, 0
      %v379 = vsel %vm123, 1, 0
      %v380 = vsel %vm124, 1, 0
      %v381 = vsel %vm125, 1, 0
      %v382 = vsel %vm126, 1, 0
      %v383 = vsel %vm127, 1, 0
      %v384 = vsel %vm128, 1, 0
      %v385 = vsel %vm129, 1, 0
      %v386 = vsel %vm130, 1, 0
      %v387 = vsel %vm131, 1, 0
      %v388 = vsel %vm132, 1, 0
      %v389 = vsel %vm133, 1, 0
      %v390 = vsel %vm134, 1, 0
      %v391 = vsel %vm135, 1, 0
      %v392 = vsel %vm136, 1, 0
      %v393 = vsel %vm137, 1, 0
      %v394 = vsel %vm138, 1, 0
      %v395 = vsel %vm139, 1, 0
      %v396 = vsel %vm140, 1, 0
      %v397 = vsel %vm141, 1, 0
      %v398 = vsel %vm142, 1, 0
      %v399 = vsel %vm143, 1, 0
      %v400 = vsel %vm144, 1, 0
      %v401 = vsel %vm145, 1, 0
      %v402 = vsel %vm146, 1, 0
      %v403 = vsel %vm147, 1, 0
      %v404 = vsel %vm148, 1, 0
      %v405 = vsel %vm149, 1, 0
      %v406 = vsel %vm150, 1, 0
      %v407 = vsel %vm151, 1, 0
      %v408 = vsel %vm152, 1, 0
      %v409 = vsel %vm153, 1, 0
      %v410 = vsel %vm154, 1, 0
      %v411 = vsel %vm155, 1, 0
      %v412 = vsel %vm156, 1, 0
      %v413 = vsel %vm157, 1, 0
      %v414 = vsel %vm158, 1, 0
      %v415 = vsel %vm159, 1, 0
      %v416 = vsel %vm160, 1, 0
      %v417 = vsel %vm161, 1, 0
      %v418 = vsel %vm162, 1, 0
      %v419 = vsel %vm163, 1, 0
      %v420 = vsel %vm164, 1, 0
      %v421 = vsel %vm165, 1, 0
      %v422 = vsel %vm166, 1, 0
      %v423 = vsel %vm167, 1, 0
      %v424 = vsel %vm168, 1, 0
      %v425 = vsel %vm169, 1, 0
      %v426 = vsel %vm170, 1, 0
      %v427 = vsel %vm171, 1, 0
      %v428 = vsel %vm172, 1, 0
      %v429 = vsel %vm173, 1, 0
      %v430 = vsel %vm174, 1, 0
      %v431 = vsel %vm175, 1, 0
      %v432 = vsel %vm176, 1, 0
      %v433 = vsel %vm177, 1, 0
      %v434 = vsel %vm178, 1, 0
      %v435 = vsel %vm179, 1, 0
      %v436 = vsel %vm180, 1, 0
      %v437 = vsel %vm181, 1, 0
      %v438 = vsel %vm182, 1, 0
      %v439 = vsel %vm183, 1, 0
      %v440 = vsel %vm184, 1, 0
      %v441 = vsel %vm185, 1, 0
      %v442 = vsel %vm186, 1, 0
      %v443 = vsel %vm187, 1, 0
      %v444 = vsel %vm188, 1, 0
      %v445 = vsel %vm189, 1, 0
      %v446 = vsel %vm190, 1, 0
      %v447 = vsel %vm191, 1, 0
      %v448 = vsel %vm192, 1, 0
      %v449 = vsel %vm193, 1, 0
      %v450 = vsel %vm194, 1, 0
      %v451 = vsel %vm195, 1, 0
      %v452 = vsel %vm196, 1, 0
      %v453 = vsel %vm197, 1, 0
      %v454 = vsel %vm198, 1, 0
      %v455 = vsel %vm199, 1, 0
      %v456 = vsel %vm200, 1, 0
      %v457 = vsel %vm201, 1, 0
      %v458 = vsel %vm202, 1, 0
      %v459 = vsel %vm203, 1, 0
      %v460 = vsel %vm204, 1, 0
      %v461 = vsel %vm205, 1, 0
      %v462 = vsel %vm206, 1, 0
      %v463 = vsel %vm207, 1, 0
      %v464 = vsel %vm208, 1, 0
      %v465 = vsel %vm209, 1, 0
      %v466 = vsel %vm210, 1, 0
      %v467 = vsel %vm211, 1, 0
      %v468 = vsel %vm212, 1, 0
      %v469 = vsel %vm213, 1, 0
      %v470 = vsel %vm214, 1, 0
      %v471 = vsel %vm215, 1, 0
      %v472 = vsel %vm216, 1, 0
      %v473 = vsel %vm217, 1, 0
      %v474 = vsel %vm218, 1, 0
      %v475 = vsel %vm219, 1, 0
      %v476 = vsel %vm220, 1, 0
      %v477 = vsel %vm221, 1, 0
      %v478 = vsel %vm222, 1, 0
      %v479 = vsel %vm223, 1, 0
      %v480 = vsel %vm224, 1, 0
      %v481 = vsel %vm225, 1, 0
      %v482 = vsel %vm226, 1, 0
      %v483 = vsel %vm227, 1, 0
      %v484 = vsel %vm228, 1, 0
      %v485 = vsel %vm229, 1, 0
      %v486 = vsel %vm230, 1, 0
      %v487 = vsel %vm231, 1, 0
      %v488 = vsel %vm232, 1, 0
      %v489 = vsel %vm233, 1, 0
      %v490 = vsel %vm234, 1, 0
      %v491 = vsel %vm235, 1, 0
      %v492 = vsel %vm236, 1, 0
      %v493 = vsel %vm237, 1, 0
      %v494 = vsel %vm238, 1, 0
      %v495 = vsel %vm239, 1, 0
      %v496 = vsel %vm240, 1, 0
      %v497 = vsel %vm241, 1, 0
      %v498 = vsel %vm242, 1, 0
      %v499 = vsel %vm243, 1, 0
      %v500 = vsel %vm244, 1, 0
      %v501 = vsel %vm245, 1, 0
      %v502 = vsel %vm246, 1, 0
      %v503 = vsel %vm247, 1, 0
      %v504 = vsel %vm248, 1, 0
      %v505 = vsel %vm249, 1, 0
      %v506 = vsel %vm250, 1, 0
      %v507 = vsel %vm251, 1, 0
      %v508 = vsel %vm252, 1, 0
      %v509 = vsel %vm253, 1, 0
      %v510 = vsel %vm254, 1, 0
      %v511 = vsel %vm255, 1, 0
      %v512 = vsel %vm256, 1, 0
      %v513 = vsel %vm257, 1, 0
      %v514 = vsel %vm258, 1, 0
      %v515 = vsel %vm259, 1, 0
      %v516 = vsel %vm260, 1, 0
      %v517 = vsel %vm261, 1, 0
      %v518 = vsel %vm262, 1, 0
      %v519 = vsel %vm263, 1, 0
      %v520 = vsel %vm264, 1, 0
      %v521 = vsel %vm265, 1, 0
      %v522 = vsel %vm266, 1, 0
      %v523 = vsel %vm267, 1, 0
      %v524 = vsel %vm268, 1, 0
      %v525 = vsel %vm269, 1, 0
      %v526 = vsel %vm270, 1, 0
      %v527 = vsel %vm271, 1, 0
      %v528 = vsel %vm272, 1, 0
      %v529 = vsel %vm273, 1, 0
      %v530 = vsel %vm274, 1, 0
      %v531 = vsel %vm275, 1, 0
      %v532 = vsel %vm276, 1, 0
      %v533 = vsel %vm277, 1, 0
      %v534 = vsel %vm278, 1, 0
      %v535 = vsel %vm279, 1, 0
      %v536 = vsel %vm280, 1, 0
      %v537 = vsel %vm281, 1, 0
      %v538 = vsel %vm282, 1, 0
      %v539 = vsel %vm283, 1, 0
      %v540 = vsel %vm284, 1, 0
      %v541 = vsel %vm285, 1, 0
      %v542 = vsel %vm286, 1, 0
      %v543 = vsel %vm287, 1, 0
      %v544 = vsel %vm288, 1, 0
      %v545 = vsel %vm289, 1, 0
      %v546 = vsel %vm290, 1, 0
      %v547 = vsel %vm291, 1, 0
      %v548 = vsel %vm292, 1, 0
      %v549 = vsel %vm293, 1, 0
      %v550 = vsel %vm294, 1, 0
      %v551 = vsel %vm295, 1, 0
      %v552 = vsel %vm296, 1, 0
      %v553 = vsel %vm297, 1, 0
      %v554 = vsel %vm298, 1, 0
      %v555 = vsel %vm299, 1, 0
      %v556 = vsel %vm300, 1, 0
      %v557 = vsel %vm301, 1, 0
      %v558 = vsel %vm302, 1, 0
      %v559 = vsel %vm303, 1, 0
      %v560 = vsel %vm304, 1, 0
      %v561 = vsel %vm305, 1, 0
      %v562 = vsel %vm306, 1, 0
      %v563 = vsel %vm307, 1, 0
      %v564 = vsel %vm308, 1, 0
      %v565 = vsel %vm309, 1, 0
      %v566 = vsel %vm310, 1, 0
      %v567 = vsel %vm311, 1, 0
      %v568 = vsel %vm312, 1, 0
      %v569 = vsel %vm313, 1, 0
      %v570 = vsel %vm314, 1, 0
      %v571 = vsel %vm315, 1, 0
      %v572 = vsel %vm316, 1, 0
      %v573 = vsel %vm317, 1, 0
      %v574 = vsel %vm318, 1, 0
      %v575 = vsel %vm319, 1, 0
      %v576 = vsel %vm320, 1, 0
      %v577 = vsel %vm321, 1, 0
      %v578 = vsel %vm322, 1, 0
      %v579 = vsel %vm323, 1, 0
      %v580 = vsel %vm324, 1, 0
      %v581 = vsel %vm325, 1, 0
      %v582 = vsel %vm326, 1, 0
      %v583 = vsel %vm327, 1, 0
      %v584 = vsel %vm328, 1, 0
      %v585 = vsel %vm329, 1, 0
      %v586 = vsel %vm330, 1, 0
      %v587 = vsel %vm331, 1, 0
      %v588 = vsel %vm332, 1, 0
      %v589 = vsel %vm333, 1, 0
      %v590 = vsel %vm334, 1, 0
      %v591 = vsel %vm335, 1, 0
      %v592 = vsel %vm336, 1, 0
      %v593 = vsel %vm337, 1, 0
      %v594 = vsel %vm338, 1, 0
      %v595 = vsel %vm339, 1, 0
      %v596 = vsel %vm340, 1, 0
      %v597 = vsel %vm341, 1, 0
      %v598 = vsel %vm342, 1, 0
      %v599 = vsel %vm343, 1, 0
      %v600 = vsel %vm344, 1, 0
      %v601 = vsel %vm345, 1, 0
      %v602 = vcvt.s32.f32 %v346
      %v603 = vcvt.s32.f32 %v347
      %v604 = vcvt.s32.f32 %v348
      %v605 = vcvt.s32.f32 %v349
      %v606 = vcvt.s32.f32 %v350
      %v607 = vcvt.s32.f32 %v351
      %v608 = vcvt.s32.f32 %v352
      %v609 = vcvt.s32.f32 %v353
      %v610 = vcvt.s32.f32 %v354
      %v611 = vcvt.s32.f32 %v355
      %v612 = vcvt.s32.f32 %v356
      %v613 = vcvt.s32.f32 %v357
      %v614 = vcvt.s32.f32 %v358
      %v615 = vcvt.s32.f32 %v359
      %v616 = vcvt.s32.f32 %v360
      %v617 = vcvt.s32.f32 %v361
      %v618 = vcvt.s32.f32 %v362
      %v619 = vcvt.s32.f32 %v363
      %v620 = vcvt.s32.f32 %v364
      %v621 = vcvt.s32.f32 %v365
      %v622 = vcvt.s32.f32 %v366
      %v623 = vcvt.s32.f32 %v367
      %v624 = vcvt.s32.f32 %v368
      %v625 = vcvt.s32.f32 %v369
      %v626 = vcvt.s32.f32 %v370
      %v627 = vcvt.s32.f32 %v371
      %v628 = vcvt.s32.f32 %v372
      %v629 = vcvt.s32.f32 %v373
      %v630 = vcvt.s32.f32 %v374
      %v631 = vcvt.s32.f32 %v375
      %v632 = vcvt.s32.f32 %v376
      %v633 = vcvt.s32.f32 %v377
      %v634 = vcvt.s32.f32 %v378
      %v635 = vcvt.s32.f32 %v379
      %v636 = vcvt.s32.f32 %v380
      %v637 = vcvt.s32.f32 %v381
      %v638 = vcvt.s32.f32 %v382
      %v639 = vcvt.s32.f32 %v383
      %v640 = vcvt.s32.f32 %v384
      %v641 = vcvt.s32.f32 %v385
      %v642 = vcvt.s32.f32 %v386
      %v643 = vcvt.s32.f32 %v387
      %v644 = vcvt.s32.f32 %v388
      %v645 = vcvt.s32.f32 %v389
      %v646 = vcvt.s32.f32 %v390
      %v647 = vcvt.s32.f32 %v391
      %v648 = vcvt.s32.f32 %v392
      %v649 = vcvt.s32.f32 %v393
      %v650 = vcvt.s32.f32 %v394
      %v651 = vcvt.s32.f32 %v395
      %v652 = vcvt.s32.f32 %v396
      %v653 = vcvt.s32.f32 %v397
      %v654 = vcvt.s32.f32 %v398
      %v655 = vcvt.s32.f32 %v399
      %v656 = vcvt.s32.f32 %v400
      %v657 = vcvt.s32.f32 %v401
      %v658 = vcvt.s32.f32 %v402
      %v659 = vcvt.s32.f32 %v403
      %v660 = vcvt.s32.f32 %v404
      %v661 = vcvt.s32.f32 %v405
      %v662 = vcvt.s32.f32 %v406
      %v663 = vcvt.s32.f32 %v407
      %v664 = vcvt.s32.f32 %v408
      %v665 = vcvt.s32.f32 %v409
      %v666 = vcvt.s32.f32 %v410
      %v667 = vcvt.s32.f32 %v411
      %v668 = vcvt.s32.f32 %v412
      %v669 = vcvt.s32.f32 %v413
      %v670 = vcvt.s32.f32 %v414
      %v671 = vcvt.s32.f32 %v415
      %v672 = vcvt.s32.f32 %v416
      %v673 = vcvt.s32.f32 %v417
      %v674 = vcvt.s32.f32 %v418
      %v675 = vcvt.s32.f32 %v419
      %v676 = vcvt.s32.f32 %v420
      %v677 = vcvt.s32.f32 %v421
      %v678 = vcvt.s32.f32 %v422
      %v679 = vcvt.s32.f32 %v423
      %v680 = vcvt.s32.f32 %v424
      %v681 = vcvt.s32.f32 %v425
      %v682 = vcvt.s32.f32 %v426
      %v683 = vcvt.s32.f32 %v427
      %v684 = vcvt.s32.f32 %v428
      %v685 = vcvt.s32.f32 %v429
      %v686 = vcvt.s32.f32 %v430
      %v687 = vcvt.s32.f32 %v431
      %v688 = vcvt.s32.f32 %v432
      %v689 = vcvt.s32.f32 %v433
      %v690 = vcvt.s32.f32 %v434
      %v691 = vcvt.s32.f32 %v435
      %v692 = vcvt.s32.f32 %v436
      %v693 = vcvt.s32.f32 %v437
      %v694 = vcvt.s32.f32 %v438
      %v695 = vcvt.s32.f32 %v439
      %v696 = vcvt.s32.f32 %v440
      %v697 = vcvt.s32.f32 %v441
      %v698 = vcvt.s32.f32 %v442
      %v699 = vcvt.s32.f32 %v443
      %v700 = vcvt.s32.f32 %v444
      %v701 = vcvt.s32.f32 %v445
      %v702 = vcvt.s32.f32 %v446
      %v703 = vcvt.s32.f32 %v447
      %v704 = vcvt.s32.f32 %v448
      %v705 = vcvt.s32.f32 %v449
      %v706 = vcvt.s32.f32 %v450
      %v707 = vcvt.s32.f32 %v451
      %v708 = vcvt.s32.f32 %v452
      %v709 = vcvt.s32.f32 %v453
      %v710 = vcvt.s32.f32 %v454
      %v711 = vcvt.s32.f32 %v455
      %v712 = vcvt.s32.f32 %v456
      %v713 = vcvt.s32.f32 %v457
      %v714 = vcvt.s32.f32 %v458
      %v715 = vcvt.s32.f32 %v459
      %v716 = vcvt.s32.f32 %v460
      %v717 = vcvt.s32.f32 %v461
      %v718 = vcvt.s32.f32 %v462
      %v719 = vcvt.s32.f32 %v463
      %v720 = vcvt.s32.f32 %v464
      %v721 = vcvt.s32.f32 %v465
      %v722 = vcvt.s32.f32 %v466
      %v723 = vcvt.s32.f32 %v467
      %v724 = vcvt.s32.f32 %v468
      %v725 = vcvt.s32.f32 %v469
      %v726 = vcvt.s32.f32 %v470
      %v727 = vcvt.s32.f32 %v471
      %v728 = vcvt.s32.f32 %v472
      %v729 = vcvt.s32.f32 %v473
      %v730 = vcvt.s32.f32 %v474
      %v731 = vcvt.s32.f32 %v475
      %v732 = vcvt.s32.f32 %v476
      %v733 = vcvt.s32.f32 %v477
      %v734 = vcvt.s32.f32 %v478
      %v735 = vcvt.s32.f32 %v479
      %v736 = vcvt.s32.f32 %v480
      %v737 = vcvt.s32.f32 %v481
      %v738 = vcvt.s32.f32 %v482
      %v739 = vcvt.s32.f32 %v483
      %v740 = vcvt.s32.f32 %v484
      %v741 = vcvt.s32.f32 %v485
      %v742 = vcvt.s32.f32 %v486
      %v743 = vcvt.s32.f32 %v487
      %v744 = vcvt.s32.f32 %v488
      %v745 = vcvt.s32.f32 %v489
      %v746 = vcvt.s32.f32 %v490
      %v747 = vcvt.s32.f32 %v491
      %v748 = vcvt.s32.f32 %v492
      %v749 = vcvt.s32.f32 %v493
      %v750 = vcvt.s32.f32 %v494
      %v751 = vcvt.s32.f32 %v495
      %v752 = vcvt.s32.f32 %v496
      %v753 = vcvt.s32.f32 %v497
      %v754 = vcvt.s32.f32 %v498
      %v755 = vcvt.s32.f32 %v499
      %v756 = vcvt.s32.f32 %v500
      %v757 = vcvt.s32.f32 %v501
      %v758 = vcvt.s32.f32 %v502
      %v759 = vcvt.s32.f32 %v503
      %v760 = vcvt.s32.f32 %v504
      %v761 = vcvt.s32.f32 %v505
      %v762 = vcvt.s32.f32 %v506
      %v763 = vcvt.s32.f32 %v507
      %v764 = vcvt.s32.f32 %v508
      %v765 = vcvt.s32.f32 %v509
      %v766 = vcvt.s32.f32 %v510
      %v767 = vcvt.s32.f32 %v511
      %v768 = vcvt.s32.f32 %v512
      %v769 = vcvt.s32.f32 %v513
      %v770 = vcvt.s32.f32 %v514
      %v771 = vcvt.s32.f32 %v515
      %v772 = vcvt.s32.f32 %v516
      %v773 = vcvt.s32.f32 %v517
      %v774 = vcvt.s32.f32 %v518
      %v775 = vcvt.s32.f32 %v519
      %v776 = vcvt.s32.f32 %v520
      %v777 = vcvt.s32.f32 %v521
      %v778 = vcvt.s32.f32 %v522
      %v779 = vcvt.s32.f32 %v523
      %v780 = vcvt.s32.f32 %v524
      %v781 = vcvt.s32.f32 %v525
      %v782 = vcvt.s32.f32 %v526
      %v783 = vcvt.s32.f32 %v527
      %v784 = vcvt.s32.f32 %v528
      %v785 = vcvt.s32.f32 %v529
      %v786 = vcvt.s32.f32 %v530
      %v787 = vcvt.s32.f32 %v531
      %v788 = vcvt.s32.f32 %v532
      %v789 = vcvt.s32.f32 %v533
      %v790 = vcvt.s32.f32 %v534
      %v791 = vcvt.s32.f32 %v535
      %v792 = vcvt.s32.f32 %v536
      %v793 = vcvt.s32.f32 %v537
      %v794 = vcvt.s32.f32 %v538
      %v795 = vcvt.s32.f32 %v539
      %v796 = vcvt.s32.f32 %v540
      %v797 = vcvt.s32.f32 %v541
      %v798 = vcvt.s32.f32 %v542
      %v799 = vcvt.s32.f32 %v543
      %v800 = vcvt.s32.f32 %v544
      %v801 = vcvt.s32.f32 %v545
      %v802 = vcvt.s32.f32 %v546
      %v803 = vcvt.s32.f32 %v547
      %v804 = vcvt.s32.f32 %v548
      %v805 = vcvt.s32.f32 %v549
      %v806 = vcvt.s32.f32 %v550
      %v807 = vcvt.s32.f32 %v551
      %v808 = vcvt.s32.f32 %v552
      %v809 = vcvt.s32.f32 %v553
      %v810 = vcvt.s32.f32 %v554
      %v811 = vcvt.s32.f32 %v555
      %v812 = vcvt.s32.f32 %v556
      %v813 = vcvt.s32.f32 %v557
      %v814 = vcvt.s32.f32 %v558
      %v815 = vcvt.s32.f32 %v559
      %v816 = vcvt.s32.f32 %v560
      %v817 = vcvt.s32.f32 %v561
      %v818 = vcvt.s32.f32 %v562
      %v819 = vcvt.s32.f32 %v563
      %v820 = vcvt.s32.f32 %v564
      %v821 = vcvt.s32.f32 %v565
      %v822 = vcvt.s32.f32 %v566
      %v823 = vcvt.s32.f32 %v567
      %v824 = vcvt.s32.f32 %v568
      %v825 = vcvt.s32.f32 %v569
      %v826 = vcvt.s32.f32 %v570
      %v827 = vcvt.s32.f32 %v571
      %v828 = vcvt.s32.f32 %v572
      %v829 = vcvt.s32.f32 %v573
      %v830 = vcvt.s32.f32 %v574
      %v831 = vcvt.s32.f32 %v575
      %v832 = vcvt.s32.f32 %v576
      %v833 = vcvt.s32.f32 %v577
      %v834 = vcvt.s32.f32 %v578
      %v835 = vcvt.s32.f32 %v579
      %v836 = vcvt.s32.f32 %v580
      %v837 = vcvt.s32.f32 %v581
      %v838 = vcvt.s32.f32 %v582
      %v839 = vcvt.s32.f32 %v583
      %v840 = vcvt.s32.f32 %v584
      %v841 = vcvt.s32.f32 %v585
      %v842 = vcvt.s32.f32 %v586
      %v843 = vcvt.s32.f32 %v587
      %v844 = vcvt.s32.f32 %v588
      %v845 = vcvt.s32.f32 %v589
      %v846 = vcvt.s32.f32 %v590
      %v847 = vcvt.s32.f32 %v591
      %v848 = vcvt.s32.f32 %v592
      %v849 = vcvt.s32.f32 %v593
      %v850 = vcvt.s32.f32 %v594
      %v851 = vcvt.s32.f32 %v595
      %v852 = vcvt.s32.f32 %v596
      %v853 = vcvt.s32.f32 %v597
      %v854 = vcvt.s32.f32 %v598
      %v855 = vcvt.s32.f32 %v599
      %v856 = vcvt.s32.f32 %v600
      %v857 = vcvt.s32.f32 %v601
      %v858 = vpack.c.bf16 %v603, %v602
      %v859 = vpack.c.bf16 %v605, %v604
      %v860 = vpack.c.bf16 %v607, %v606
      %v861 = vpack.c.bf16 %v609, %v608
      %v862 = vpack.c.bf16 %v611, %v610
      %v863 = vpack.c.bf16 %v613, %v612
      %v864 = vpack.c.bf16 %v615, %v614
      %v865 = vpack.c.bf16 %v617, %v616
      %v866 = vpack.c.bf16 %v619, %v618
      %v867 = vpack.c.bf16 %v621, %v620
      %v868 = vpack.c.bf16 %v623, %v622
      %v869 = vpack.c.bf16 %v625, %v624
      %v870 = vpack.c.bf16 %v627, %v626
      %v871 = vpack.c.bf16 %v629, %v628
      %v872 = vpack.c.bf16 %v631, %v630
      %v873 = vpack.c.bf16 %v633, %v632
      %v874 = vpack.c.bf16 %v635, %v634
      %v875 = vpack.c.bf16 %v637, %v636
      %v876 = vpack.c.bf16 %v639, %v638
      %v877 = vpack.c.bf16 %v641, %v640
      %v878 = vpack.c.bf16 %v643, %v642
      %v879 = vpack.c.bf16 %v645, %v644
      %v880 = vpack.c.bf16 %v647, %v646
      %v881 = vpack.c.bf16 %v649, %v648
      %v882 = vpack.c.bf16 %v651, %v650
      %v883 = vpack.c.bf16 %v653, %v652
      %v884 = vpack.c.bf16 %v655, %v654
      %v885 = vpack.c.bf16 %v657, %v656
      %v886 = vpack.c.bf16 %v659, %v658
      %v887 = vpack.c.bf16 %v661, %v660
      %v888 = vpack.c.bf16 %v663, %v662
      %v889 = vpack.c.bf16 %v665, %v664
      %v890 = vpack.c.bf16 %v667, %v666
      %v891 = vpack.c.bf16 %v669, %v668
      %v892 = vpack.c.bf16 %v671, %v670
      %v893 = vpack.c.bf16 %v673, %v672
      %v894 = vpack.c.bf16 %v675, %v674
      %v895 = vpack.c.bf16 %v677, %v676
      %v896 = vpack.c.bf16 %v679, %v678
      %v897 = vpack.c.bf16 %v681, %v680
      %v898 = vpack.c.bf16 %v683, %v682
      %v899 = vpack.c.bf16 %v685, %v684
      %v900 = vpack.c.bf16 %v687, %v686
      %v901 = vpack.c.bf16 %v689, %v688
      %v902 = vpack.c.bf16 %v691, %v690
      %v903 = vpack.c.bf16 %v693, %v692
      %v904 = vpack.c.bf16 %v695, %v694
      %v905 = vpack.c.bf16 %v697, %v696
      %v906 = vpack.c.bf16 %v699, %v698
      %v907 = vpack.c.bf16 %v701, %v700
      %v908 = vpack.c.bf16 %v703, %v702
      %v909 = vpack.c.bf16 %v705, %v704
      %v910 = vpack.c.bf16 %v707, %v706
      %v911 = vpack.c.bf16 %v709, %v708
      %v912 = vpack.c.bf16 %v711, %v710
      %v913 = vpack.c.bf16 %v713, %v712
      %v914 = vpack.c.bf16 %v715, %v714
      %v915 = vpack.c.bf16 %v717, %v716
      %v916 = vpack.c.bf16 %v719, %v718
      %v917 = vpack.c.bf16 %v721, %v720
      %v918 = vpack.c.bf16 %v723, %v722
      %v919 = vpack.c.bf16 %v725, %v724
      %v920 = vpack.c.bf16 %v727, %v726
      %v921 = vpack.c.bf16 %v729, %v728
      %v922 = vpack.c.bf16 %v731, %v730
      %v923 = vpack.c.bf16 %v733, %v732
      %v924 = vpack.c.bf16 %v735, %v734
      %v925 = vpack.c.bf16 %v737, %v736
      %v926 = vpack.c.bf16 %v739, %v738
      %v927 = vpack.c.bf16 %v741, %v740
      %v928 = vpack.c.bf16 %v743, %v742
      %v929 = vpack.c.bf16 %v745, %v744
      %v930 = vpack.c.bf16 %v747, %v746
      %v931 = vpack.c.bf16 %v749, %v748
      %v932 = vpack.c.bf16 %v751, %v750
      %v933 = vpack.c.bf16 %v753, %v752
      %v934 = vpack.c.bf16 %v755, %v754
      %v935 = vpack.c.bf16 %v757, %v756
      %v936 = vpack.c.bf16 %v759, %v758
      %v937 = vpack.c.bf16 %v761, %v760
      %v938 = vpack.c.bf16 %v763, %v762
      %v939 = vpack.c.bf16 %v765, %v764
      %v940 = vpack.c.bf16 %v767, %v766
      %v941 = vpack.c.bf16 %v769, %v768
      %v942 = vpack.c.bf16 %v771, %v770
      %v943 = vpack.c.bf16 %v773, %v772
      %v944 = vpack.c.bf16 %v775, %v774
      %v945 = vpack.c.bf16 %v777, %v776
      %v946 = vpack.c.bf16 %v779, %v778
      %v947 = vpack.c.bf16 %v781, %v780
      %v948 = vpack.c.bf16 %v783, %v782
      %v949 = vpack.c.bf16 %v785, %v784
      %v950 = vpack.c.bf16 %v787, %v786
      %v951 = vpack.c.bf16 %v789, %v788
      %v952 = vpack.c.bf16 %v791, %v790
      %v953 = vpack.c.bf16 %v793, %v792
      %v954 = vpack.c.bf16 %v795, %v794
      %v955 = vpack.c.bf16 %v797, %v796
      %v956 = vpack.c.bf16 %v799, %v798
      %v957 = vpack.c.bf16 %v801, %v800
      %v958 = vpack.c.bf16 %v803, %v802
      %v959 = vpack.c.bf16 %v805, %v804
      %v960 = vpack.c.bf16 %v807, %v806
      %v961 = vpack.c.bf16 %v809, %v808
      %v962 = vpack.c.bf16 %v811, %v810
      %v963 = vpack.c.bf16 %v813, %v812
      %v964 = vpack.c.bf16 %v815, %v814
      %v965 = vpack.c.bf16 %v817, %v816
      %v966 = vpack.c.bf16 %v819, %v818
      %v967 = vpack.c.bf16 %v821, %v820
      %v968 = vpack.c.bf16 %v823, %v822
      %v969 = vpack.c.bf16 %v825, %v824
      %v970 = vpack.c.bf16 %v827, %v826
      %v971 = vpack.c.bf16 %v829, %v828
      %v972 = vpack.c.bf16 %v831, %v830
      %v973 = vpack.c.bf16 %v833, %v832
      %v974 = vpack.c.bf16 %v835, %v834
      %v975 = vpack.c.bf16 %v837, %v836
      %v976 = vpack.c.bf16 %v839, %v838
      %v977 = vpack.c.bf16 %v841, %v840
      %v978 = vpack.c.bf16 %v843, %v842
      %v979 = vpack.c.bf16 %v845, %v844
      %v980 = vpack.c.bf16 %v847, %v846
      %v981 = vpack.c.bf16 %v849, %v848
      %v982 = vpack.c.bf16 %v851, %v850
      %v983 = vpack.c.bf16 %v853, %v852
      %v984 = vpack.c.bf16 %v855, %v854
      %v985 = vpack.c.bf16 %v857, %v856
      %986 = vst [vmem:[#allocation2] sm:$0xff] %v858
      %987 = vst [vmem:[#allocation2 + $0x8] sm:$0xff] %v859
      %988 = vst [vmem:[#allocation2 + $0x10] sm:$0xff] %v860
      %989 = vst [vmem:[#allocation2 + $0x18] sm:$0xff] %v861
      %990 = vst [vmem:[#allocation2 + $0x20] sm:$0xff] %v862
      %991 = vst [vmem:[#allocation2 + $0x28] sm:$0xff] %v863
      %992 = vst [vmem:[#allocation2 + $0x30] sm:$0xff] %v864
      %993 = vst [vmem:[#allocation2 + $0x38] sm:$0xff] %v865
      %994 = vst [vmem:[#allocation2 + $0x40] sm:$0xff] %v866
      %995 = vst [vmem:[#allocation2 + $0x48] sm:$0xff] %v867
      %996 = vst [vmem:[#allocation2 + $0x50] sm:$0xff] %v868
      %997 = vst [vmem:[#allocation2 + $0x58] sm:$0xff] %v869
      %998 = vst [vmem:[#allocation2 + $0x60] sm:$0xff] %v870
      %999 = vst [vmem:[#allocation2 + $0x68] sm:$0xff] %v871
      %1000 = vst [vmem:[#allocation2 + $0x70] sm:$0xff] %v872
      %1001 = vst [vmem:[#allocation2 + $0x78] sm:$0xff] %v873
      %1002 = vst [vmem:[#allocation2 + $0x80] sm:$0xff] %v874
      %1003 = vst [vmem:[#allocation2 + $0x88] sm:$0xff] %v875
      %1004 = vst [vmem:[#allocation2 + $0x90] sm:$0xff] %v876
      %1005 = vst [vmem:[#allocation2 + $0x98] sm:$0xff] %v877
      %1006 = vst [vmem:[#allocation2 + $0xa0] sm:$0xff] %v878
      %1007 = vst [vmem:[#allocation2 + $0xa8] sm:$0xff] %v879
      %1008 = vst [vmem:[#allocation2 + $0xb0] sm:$0xff] %v880
      %1009 = vst [vmem:[#allocation2 + $0xb8] sm:$0xff] %v881
      %1010 = vst [vmem:[#allocation2 + $0xc0] sm:$0xff] %v882
      %1011 = vst [vmem:[#allocation2 + $0xc8] sm:$0xff] %v883
      %1012 = vst [vmem:[#allocation2 + $0xd0] sm:$0xff] %v884
      %1013 = vst [vmem:[#allocation2 + $0xd8] sm:$0xff] %v885
      %1014 = vst [vmem:[#allocation2 + $0xe0] sm:$0xff] %v886
      %1015 = vst [vmem:[#allocation2 + $0xe8] sm:$0xff] %v887
      %1016 = vst [vmem:[#allocation2 + $0xf0] sm:$0xff] %v888
      %1017 = vst [vmem:[#allocation2 + $0xf8] sm:$0xff] %v889
      %1018 = vst [vmem:[#allocation2 + $0x100] sm:$0xff] %v890
      %1019 = vst [vmem:[#allocation2 + $0x108] sm:$0xff] %v891
      %1020 = vst [vmem:[#allocation2 + $0x110] sm:$0xff] %v892
      %1021 = vst [vmem:[#allocation2 + $0x118] sm:$0xff] %v893
      %1022 = vst [vmem:[#allocation2 + $0x120] sm:$0xff] %v894
      %1023 = vst [vmem:[#allocation2 + $0x128] sm:$0xff] %v895
      %1024 = vst [vmem:[#allocation2 + $0x130] sm:$0xff] %v896
      %1025 = vst [vmem:[#allocation2 + $0x138] sm:$0xff] %v897
      %1026 = vst [vmem:[#allocation2 + $0x140] sm:$0xff] %v898
      %1027 = vst [vmem:[#allocation2 + $0x148] sm:$0xff] %v899
      %1028 = vst [vmem:[#allocation2 + $0x150] sm:$0xff] %v900
      %1029 = vst [vmem:[#allocation2 + $0x158] sm:$0xff] %v901
      %1030 = vst [vmem:[#allocation2 + $0x160] sm:$0xff] %v902
      %1031 = vst [vmem:[#allocation2 + $0x168] sm:$0xff] %v903
      %1032 = vst [vmem:[#allocation2 + $0x170] sm:$0xff] %v904
      %1033 = vst [vmem:[#allocation2 + $0x178] sm:$0xff] %v905
      %1034 = vst [vmem:[#allocation2 + $0x180] sm:$0xff] %v906
      %1035 = vst [vmem:[#allocation2 + $0x188] sm:$0xff] %v907
      %1036 = vst [vmem:[#allocation2 + $0x190] sm:$0xff] %v908
      %1037 = vst [vmem:[#allocation2 + $0x198] sm:$0xff] %v909
      %1038 = vst [vmem:[#allocation2 + $0x1a0] sm:$0xff] %v910
      %1039 = vst [vmem:[#allocation2 + $0x1a8] sm:$0xff] %v911
      %1040 = vst [vmem:[#allocation2 + $0x1b0] sm:$0xff] %v912
      %1041 = vst [vmem:[#allocation2 + $0x1b8] sm:$0xff] %v913
      %1042 = vst [vmem:[#allocation2 + $0x1c0] sm:$0xff] %v914
      %1043 = vst [vmem:[#allocation2 + $0x1c8] sm:$0xff] %v915
      %1044 = vst [vmem:[#allocation2 + $0x1d0] sm:$0xff] %v916
      %1045 = vst [vmem:[#allocation2 + $0x1d8] sm:$0xff] %v917
      %1046 = vst [vmem:[#allocation2 + $0x1e0] sm:$0xff] %v918
      %1047 = vst [vmem:[#allocation2 + $0x1e8] sm:$0xff] %v919
      %1048 = vst [vmem:[#allocation2 + $0x1f0] sm:$0xff] %v920
      %1049 = vst [vmem:[#allocation2 + $0x1f8] sm:$0xff] %v921
      %1050 = vst [vmem:[#allocation2 + $0x200] sm:$0xff] %v922
      %1051 = vst [vmem:[#allocation2 + $0x208] sm:$0xff] %v923
      %1052 = vst [vmem:[#allocation2 + $0x210] sm:$0xff] %v924
      %1053 = vst [vmem:[#allocation2 + $0x218] sm:$0xff] %v925
      %1054 = vst [vmem:[#allocation2 + $0x220] sm:$0xff] %v926
      %1055 = vst [vmem:[#allocation2 + $0x228] sm:$0xff] %v927
      %1056 = vst [vmem:[#allocation2 + $0x230] sm:$0xff] %v928
      %1057 = vst [vmem:[#allocation2 + $0x238] sm:$0xff] %v929
      %1058 = vst [vmem:[#allocation2 + $0x240] sm:$0xff] %v930
      %1059 = vst [vmem:[#allocation2 + $0x248] sm:$0xff] %v931
      %1060 = vst [vmem:[#allocation2 + $0x250] sm:$0xff] %v932
      %1061 = vst [vmem:[#allocation2 + $0x258] sm:$0xff] %v933
      %1062 = vst [vmem:[#allocation2 + $0x260] sm:$0xff] %v934
      %1063 = vst [vmem:[#allocation2 + $0x268] sm:$0xff] %v935
      %1064 = vst [vmem:[#allocation2 + $0x270] sm:$0xff] %v936
      %1065 = vst [vmem:[#allocation2 + $0x278] sm:$0xff] %v937
      %1066 = vst [vmem:[#allocation2 + $0x280] sm:$0xff] %v938
      %1067 = vst [vmem:[#allocation2 + $0x288] sm:$0xff] %v939
      %1068 = vst [vmem:[#allocation2 + $0x290] sm:$0xff] %v940
      %1069 = vst [vmem:[#allocation2 + $0x298] sm:$0xff] %v941
      %1070 = vst [vmem:[#allocation2 + $0x2a0] sm:$0xff] %v942
      %1071 = vst [vmem:[#allocation2 + $0x2a8] sm:$0xff] %v943
      %1072 = vst [vmem:[#allocation2 + $0x2b0] sm:$0xff] %v944
      %1073 = vst [vmem:[#allocation2 + $0x2b8] sm:$0xff] %v945
      %1074 = vst [vmem:[#allocation2 + $0x2c0] sm:$0xff] %v946
      %1075 = vst [vmem:[#allocation2 + $0x2c8] sm:$0xff] %v947
      %1076 = vst [vmem:[#allocation2 + $0x2d0] sm:$0xff] %v948
      %1077 = vst [vmem:[#allocation2 + $0x2d8] sm:$0xff] %v949
      %1078 = vst [vmem:[#allocation2 + $0x2e0] sm:$0xff] %v950
      %1079 = vst [vmem:[#allocation2 + $0x2e8] sm:$0xff] %v951
      %1080 = vst [vmem:[#allocation2 + $0x2f0] sm:$0xff] %v952
      %1081 = vst [vmem:[#allocation2 + $0x2f8] sm:$0xff] %v953
      %1082 = vst [vmem:[#allocation2 + $0x300] sm:$0xff] %v954
      %1083 = vst [vmem:[#allocation2 + $0x308] sm:$0xff] %v955
      %1084 = vst [vmem:[#allocation2 + $0x310] sm:$0xff] %v956
      %1085 = vst [vmem:[#allocation2 + $0x318] sm:$0xff] %v957
      %1086 = vst [vmem:[#allocation2 + $0x320] sm:$0xff] %v958
      %1087 = vst [vmem:[#allocation2 + $0x328] sm:$0xff] %v959
      %1088 = vst [vmem:[#allocation2 + $0x330] sm:$0xff] %v960
      %1089 = vst [vmem:[#allocation2 + $0x338] sm:$0xff] %v961
      %1090 = vst [vmem:[#allocation2 + $0x340] sm:$0xff] %v962
      %1091 = vst [vmem:[#allocation2 + $0x348] sm:$0xff] %v963
      %1092 = vst [vmem:[#allocation2 + $0x350] sm:$0xff] %v964
      %1093 = vst [vmem:[#allocation2 + $0x358] sm:$0xff] %v965
      %1094 = vst [vmem:[#allocation2 + $0x360] sm:$0xff] %v966
      %1095 = vst [vmem:[#allocation2 + $0x368] sm:$0xff] %v967
      %1096 = vst [vmem:[#allocation2 + $0x370] sm:$0xff] %v968
      %1097 = vst [vmem:[#allocation2 + $0x378] sm:$0xff] %v969
      %1098 = vst [vmem:[#allocation2 + $0x380] sm:$0xff] %v970
      %1099 = vst [vmem:[#allocation2 + $0x388] sm:$0xff] %v971
      %1100 = vst [vmem:[#allocation2 + $0x390] sm:$0xff] %v972
      %1101 = vst [vmem:[#allocation2 + $0x398] sm:$0xff] %v973
      %1102 = vst [vmem:[#allocation2 + $0x3a0] sm:$0xff] %v974
      %1103 = vst [vmem:[#allocation2 + $0x3a8] sm:$0xff] %v975
      %1104 = vst [vmem:[#allocation2 + $0x3b0] sm:$0xff] %v976
      %1105 = vst [vmem:[#allocation2 + $0x3b8] sm:$0xff] %v977
      %1106 = vst [vmem:[#allocation2 + $0x3c0] sm:$0xff] %v978
      %1107 = vst [vmem:[#allocation2 + $0x3c8] sm:$0xff] %v979
      %1108 = vst [vmem:[#allocation2 + $0x3d0] sm:$0xff] %v980
      %1109 = vst [vmem:[#allocation2 + $0x3d8] sm:$0xff] %v981
      %1110 = vst [vmem:[#allocation2 + $0x3e0] sm:$0xff] %v982
      %1111 = vst [vmem:[#allocation2 + $0x3e8] sm:$0xff] %v983
      %1112 = vst [vmem:[#allocation2 + $0x3f0] sm:$0xff] %v984
      %1113 = vst [vmem:[#allocation2 + $0x3f8] sm:$0xff] %v985
    $region13: #{loce_loss_2d.3} parent=1 // pred_fallthru
      _
    %v1114 = vld [vmem:[%s0] sm:$0xff]
    %v1115 = vld [vmem:[%s0 + $0x8] sm:$0xff]
    %v1116 = vsub.s32 0, %v1114
    %v1117 = vsub.s32 0, %v1115
    %v1118 = vand.u32 %v1116, 1
    %v1119 = vand.u32 %v1117, 1
    %v1120 = vcvt.s32.f32 %v1118
    %v1121 = vcvt.s32.f32 %v1119
    %v1122 = vand.u32 %v1116, 4294967294
    %v1123 = vand.u32 %v1117, 4294967294
    %1124 = vst [vmem:[#allocation1] ss:$2 sm:$0xff] %v1122
    %s1125 = scalar_lea.vmem [#allocation1], 16
    %1126 = vst [vmem:[%s1125] ss:$2 sm:$0xff] %v1123
    %v1127 = vld.sshfl [vmem:[#allocation1] sm:$0xff pattern:$0x75316420]
    %v1128 = vld.sshfl [vmem:[#allocation1 + $0x8] sm:$0xff pattern:$0x75316420]
    %v1129 = vld.sshfl [vmem:[#allocation1 + $0x10] sm:$0xff pattern:$0x75316420]
    %v1130 = vld.sshfl [vmem:[#allocation1 + $0x18] sm:$0xff pattern:$0x75316420]
    %v1135 = vld [vmem:[%s1] sm:$0xf]
    %v1136 = vld [vmem:[#allocation3] sm:$0xf]
    %1139 = vst [vmem:[#allocation1] ss:$2 sm:$0xff] %v1120
    %s1140 = scalar_lea.vmem [#allocation1], 16
    %1141 = vst [vmem:[%s1140] ss:$2 sm:$0xff] %v1121
    %v1142 = vld.sshfl [vmem:[#allocation1] sm:$0xff pattern:$0x75316420]
    %v1143 = vld.sshfl [vmem:[#allocation1 + $0x8] sm:$0xff pattern:$0x75316420]
    %v1144 = vld.sshfl [vmem:[#allocation1 + $0x10] sm:$0xff pattern:$0x75316420]
    %v1145 = vld.sshfl [vmem:[#allocation1 + $0x18] sm:$0xff pattern:$0x75316420]
    %v1150 = vpack.c.bf16 %v1142, %v1142
    %v1151 = vpack.c.bf16 %v1143, %v1143
    %v1152 = vpack.c.bf16 %v1144, %v1144
    %v1153 = vpack.c.bf16 %v1145, %v1145
    %v1154 = vld [vmem:[#allocation2] sm:$0xff]
    %v1155 = vld [vmem:[#allocation2 + $0x8] sm:$0xff]
    %v1156 = vld [vmem:[#allocation2 + $0x10] sm:$0xff]
    %v1157 = vld [vmem:[#allocation2 + $0x18] sm:$0xff]
    %v1158 = vld [vmem:[#allocation2 + $0x20] sm:$0xff]
    %v1159 = vld [vmem:[#allocation2 + $0x28] sm:$0xff]
    %v1160 = vld [vmem:[#allocation2 + $0x30] sm:$0xff]
    %v1161 = vld [vmem:[#allocation2 + $0x38] sm:$0xff]
    %v1162 = vld [vmem:[#allocation2 + $0x40] sm:$0xff]
    %v1163 = vld [vmem:[#allocation2 + $0x48] sm:$0xff]
    %v1164 = vld [vmem:[#allocation2 + $0x50] sm:$0xff]
    %v1165 = vld [vmem:[#allocation2 + $0x58] sm:$0xff]
    %v1166 = vld [vmem:[#allocation2 + $0x60] sm:$0xff]
    %v1167 = vld [vmem:[#allocation2 + $0x68] sm:$0xff]
    %v1168 = vld [vmem:[#allocation2 + $0x70] sm:$0xff]
    %v1169 = vld [vmem:[#allocation2 + $0x78] sm:$0xff]
    %v1170 = vld [vmem:[#allocation2 + $0x80] sm:$0xff]
    %v1171 = vld [vmem:[#allocation2 + $0x88] sm:$0xff]
    %v1172 = vld [vmem:[#allocation2 + $0x90] sm:$0xff]
    %v1173 = vld [vmem:[#allocation2 + $0x98] sm:$0xff]
    %v1174 = vld [vmem:[#allocation2 + $0xa0] sm:$0xff]
    %v1175 = vld [vmem:[#allocation2 + $0xa8] sm:$0xff]
    %v1176 = vld [vmem:[#allocation2 + $0xb0] sm:$0xff]
    %v1177 = vld [vmem:[#allocation2 + $0xb8] sm:$0xff]
    %v1178 = vld [vmem:[#allocation2 + $0xc0] sm:$0xff]
    %v1179 = vld [vmem:[#allocation2 + $0xc8] sm:$0xff]
    %v1180 = vld [vmem:[#allocation2 + $0xd0] sm:$0xff]
    %v1181 = vld [vmem:[#allocation2 + $0xd8] sm:$0xff]
    %v1182 = vld [vmem:[#allocation2 + $0xe0] sm:$0xff]
    %v1183 = vld [vmem:[#allocation2 + $0xe8] sm:$0xff]
    %v1184 = vld [vmem:[#allocation2 + $0xf0] sm:$0xff]
    %v1185 = vld [vmem:[#allocation2 + $0xf8] sm:$0xff]
    %v1186 = vld [vmem:[#allocation2 + $0x100] sm:$0xff]
    %v1187 = vld [vmem:[#allocation2 + $0x108] sm:$0xff]
    %v1188 = vld [vmem:[#allocation2 + $0x110] sm:$0xff]
    %v1189 = vld [vmem:[#allocation2 + $0x118] sm:$0xff]
    %v1190 = vld [vmem:[#allocation2 + $0x120] sm:$0xff]
    %v1191 = vld [vmem:[#allocation2 + $0x128] sm:$0xff]
    %v1192 = vld [vmem:[#allocation2 + $0x130] sm:$0xff]
    %v1193 = vld [vmem:[#allocation2 + $0x138] sm:$0xff]
    %v1194 = vld [vmem:[#allocation2 + $0x140] sm:$0xff]
    %v1195 = vld [vmem:[#allocation2 + $0x148] sm:$0xff]
    %v1196 = vld [vmem:[#allocation2 + $0x150] sm:$0xff]
    %v1197 = vld [vmem:[#allocation2 + $0x158] sm:$0xff]
    %v1198 = vld [vmem:[#allocation2 + $0x160] sm:$0xff]
    %v1199 = vld [vmem:[#allocation2 + $0x168] sm:$0xff]
    %v1200 = vld [vmem:[#allocation2 + $0x170] sm:$0xff]
    %v1201 = vld [vmem:[#allocation2 + $0x178] sm:$0xff]
    %v1202 = vld [vmem:[#allocation2 + $0x180] sm:$0xff]
    %v1203 = vld [vmem:[#allocation2 + $0x188] sm:$0xff]
    %v1204 = vld [vmem:[#allocation2 + $0x190] sm:$0xff]
    %v1205 = vld [vmem:[#allocation2 + $0x198] sm:$0xff]
    %v1206 = vld [vmem:[#allocation2 + $0x1a0] sm:$0xff]
    %v1207 = vld [vmem:[#allocation2 + $0x1a8] sm:$0xff]
    %v1208 = vld [vmem:[#allocation2 + $0x1b0] sm:$0xff]
    %v1209 = vld [vmem:[#allocation2 + $0x1b8] sm:$0xff]
    %v1210 = vld [vmem:[#allocation2 + $0x1c0] sm:$0xff]
    %v1211 = vld [vmem:[#allocation2 + $0x1c8] sm:$0xff]
    %v1212 = vld [vmem:[#allocation2 + $0x1d0] sm:$0xff]
    %v1213 = vld [vmem:[#allocation2 + $0x1d8] sm:$0xff]
    %v1214 = vld [vmem:[#allocation2 + $0x1e0] sm:$0xff]
    %v1215 = vld [vmem:[#allocation2 + $0x1e8] sm:$0xff]
    %v1216 = vld [vmem:[#allocation2 + $0x1f0] sm:$0xff]
    %v1217 = vld [vmem:[#allocation2 + $0x1f8] sm:$0xff]
    %v1218 = vld [vmem:[#allocation2 + $0x200] sm:$0xff]
    %v1219 = vld [vmem:[#allocation2 + $0x208] sm:$0xff]
    %v1220 = vld [vmem:[#allocation2 + $0x210] sm:$0xff]
    %v1221 = vld [vmem:[#allocation2 + $0x218] sm:$0xff]
    %v1222 = vld [vmem:[#allocation2 + $0x220] sm:$0xff]
    %v1223 = vld [vmem:[#allocation2 + $0x228] sm:$0xff]
    %v1224 = vld [vmem:[#allocation2 + $0x230] sm:$0xff]
    %v1225 = vld [vmem:[#allocation2 + $0x238] sm:$0xff]
    %v1226 = vld [vmem:[#allocation2 + $0x240] sm:$0xff]
    %v1227 = vld [vmem:[#allocation2 + $0x248] sm:$0xff]
    %v1228 = vld [vmem:[#allocation2 + $0x250] sm:$0xff]
    %v1229 = vld [vmem:[#allocation2 + $0x258] sm:$0xff]
    %v1230 = vld [vmem:[#allocation2 + $0x260] sm:$0xff]
    %v1231 = vld [vmem:[#allocation2 + $0x268] sm:$0xff]
    %v1232 = vld [vmem:[#allocation2 + $0x270] sm:$0xff]
    %v1233 = vld [vmem:[#allocation2 + $0x278] sm:$0xff]
    %v1234 = vld [vmem:[#allocation2 + $0x280] sm:$0xff]
    %v1235 = vld [vmem:[#allocation2 + $0x288] sm:$0xff]
    %v1236 = vld [vmem:[#allocation2 + $0x290] sm:$0xff]
    %v1237 = vld [vmem:[#allocation2 + $0x298] sm:$0xff]
    %v1238 = vld [vmem:[#allocation2 + $0x2a0] sm:$0xff]
    %v1239 = vld [vmem:[#allocation2 + $0x2a8] sm:$0xff]
    %v1240 = vld [vmem:[#allocation2 + $0x2b0] sm:$0xff]
    %v1241 = vld [vmem:[#allocation2 + $0x2b8] sm:$0xff]
    %v1242 = vld [vmem:[#allocation2 + $0x2c0] sm:$0xff]
    %v1243 = vld [vmem:[#allocation2 + $0x2c8] sm:$0xff]
    %v1244 = vld [vmem:[#allocation2 + $0x2d0] sm:$0xff]
    %v1245 = vld [vmem:[#allocation2 + $0x2d8] sm:$0xff]
    %v1246 = vld [vmem:[#allocation2 + $0x2e0] sm:$0xff]
    %v1247 = vld [vmem:[#allocation2 + $0x2e8] sm:$0xff]
    %v1248 = vld [vmem:[#allocation2 + $0x2f0] sm:$0xff]
    %v1249 = vld [vmem:[#allocation2 + $0x2f8] sm:$0xff]
    %v1250 = vld [vmem:[#allocation2 + $0x300] sm:$0xff]
    %v1251 = vld [vmem:[#allocation2 + $0x308] sm:$0xff]
    %v1252 = vld [vmem:[#allocation2 + $0x310] sm:$0xff]
    %v1253 = vld [vmem:[#allocation2 + $0x318] sm:$0xff]
    %v1254 = vld [vmem:[#allocation2 + $0x320] sm:$0xff]
    %v1255 = vld [vmem:[#allocation2 + $0x328] sm:$0xff]
    %v1256 = vld [vmem:[#allocation2 + $0x330] sm:$0xff]
    %v1257 = vld [vmem:[#allocation2 + $0x338] sm:$0xff]
    %v1258 = vld [vmem:[#allocation2 + $0x340] sm:$0xff]
    %v1259 = vld [vmem:[#allocation2 + $0x348] sm:$0xff]
    %v1260 = vld [vmem:[#allocation2 + $0x350] sm:$0xff]
    %v1261 = vld [vmem:[#allocation2 + $0x358] sm:$0xff]
    %v1262 = vld [vmem:[#allocation2 + $0x360] sm:$0xff]
    %v1263 = vld [vmem:[#allocation2 + $0x368] sm:$0xff]
    %v1264 = vld [vmem:[#allocation2 + $0x370] sm:$0xff]
    %v1265 = vld [vmem:[#allocation2 + $0x378] sm:$0xff]
    %v1266 = vld [vmem:[#allocation2 + $0x380] sm:$0xff]
    %v1267 = vld [vmem:[#allocation2 + $0x388] sm:$0xff]
    %v1268 = vld [vmem:[#allocation2 + $0x390] sm:$0xff]
    %v1269 = vld [vmem:[#allocation2 + $0x398] sm:$0xff]
    %v1270 = vld [vmem:[#allocation2 + $0x3a0] sm:$0xff]
    %v1271 = vld [vmem:[#allocation2 + $0x3a8] sm:$0xff]
    %v1272 = vld [vmem:[#allocation2 + $0x3b0] sm:$0xff]
    %v1273 = vld [vmem:[#allocation2 + $0x3b8] sm:$0xff]
    %v1274 = vld [vmem:[#allocation2 + $0x3c0] sm:$0xff]
    %v1275 = vld [vmem:[#allocation2 + $0x3c8] sm:$0xff]
    %v1276 = vld [vmem:[#allocation2 + $0x3d0] sm:$0xff]
    %v1277 = vld [vmem:[#allocation2 + $0x3d8] sm:$0xff]
    %v1278 = vld [vmem:[#allocation2 + $0x3e0] sm:$0xff]
    %v1279 = vld [vmem:[#allocation2 + $0x3e8] sm:$0xff]
    %v1280 = vld [vmem:[#allocation2 + $0x3f0] sm:$0xff]
    %v1281 = vld [vmem:[#allocation2 + $0x3f8] sm:$0xff]
    %1283 = vset.pattern.permute.xlu0 0
    %1284 = vperm.xlu0 %1283, %v1136
    %v1285 = vpop.permute.xlu0 %1284
    %v1415 = vunpack.c.l.b16 %v1154
    %v1416 = vunpack.c.h.b16 %v1154
    %v1417 = vunpack.c.l.b16 %v1155
    %v1418 = vunpack.c.h.b16 %v1155
    %v1419 = vunpack.c.l.b16 %v1156
    %v1420 = vunpack.c.h.b16 %v1156
    %v1421 = vunpack.c.l.b16 %v1157
    %v1422 = vunpack.c.h.b16 %v1157
    %v1423 = vunpack.c.l.b16 %v1158
    %v1424 = vunpack.c.h.b16 %v1158
    %v1425 = vunpack.c.l.b16 %v1159
    %v1426 = vunpack.c.h.b16 %v1159
    %v1427 = vunpack.c.l.b16 %v1160
    %v1428 = vunpack.c.h.b16 %v1160
    %v1429 = vunpack.c.l.b16 %v1161
    %v1430 = vunpack.c.h.b16 %v1161
    %v1431 = vunpack.c.l.b16 %v1162
    %v1432 = vunpack.c.h.b16 %v1162
    %v1433 = vunpack.c.l.b16 %v1163
    %v1434 = vunpack.c.h.b16 %v1163
    %v1435 = vunpack.c.l.b16 %v1164
    %v1436 = vunpack.c.h.b16 %v1164
    %v1437 = vunpack.c.l.b16 %v1165
    %v1438 = vunpack.c.h.b16 %v1165
    %v1439 = vunpack.c.l.b16 %v1166
    %v1440 = vunpack.c.h.b16 %v1166
    %v1441 = vunpack.c.l.b16 %v1167
    %v1442 = vunpack.c.h.b16 %v1167
    %v1443 = vunpack.c.l.b16 %v1168
    %v1444 = vunpack.c.h.b16 %v1168
    %v1445 = vunpack.c.l.b16 %v1169
    %v1446 = vunpack.c.h.b16 %v1169
    %v1447 = vunpack.c.l.b16 %v1170
    %v1448 = vunpack.c.h.b16 %v1170
    %v1449 = vunpack.c.l.b16 %v1171
    %v1450 = vunpack.c.h.b16 %v1171
    %v1451 = vunpack.c.l.b16 %v1172
    %v1452 = vunpack.c.h.b16 %v1172
    %v1453 = vunpack.c.l.b16 %v1173
    %v1454 = vunpack.c.h.b16 %v1173
    %v1455 = vunpack.c.l.b16 %v1174
    %v1456 = vunpack.c.h.b16 %v1174
    %v1457 = vunpack.c.l.b16 %v1175
    %v1458 = vunpack.c.h.b16 %v1175
    %v1459 = vunpack.c.l.b16 %v1176
    %v1460 = vunpack.c.h.b16 %v1176
    %v1461 = vunpack.c.l.b16 %v1177
    %v1462 = vunpack.c.h.b16 %v1177
    %v1463 = vunpack.c.l.b16 %v1178
    %v1464 = vunpack.c.h.b16 %v1178
    %v1465 = vunpack.c.l.b16 %v1179
    %v1466 = vunpack.c.h.b16 %v1179
    %v1467 = vunpack.c.l.b16 %v1180
    %v1468 = vunpack.c.h.b16 %v1180
    %v1469 = vunpack.c.l.b16 %v1181
    %v1470 = vunpack.c.h.b16 %v1181
    %v1471 = vunpack.c.l.b16 %v1182
    %v1472 = vunpack.c.h.b16 %v1182
    %v1473 = vunpack.c.l.b16 %v1183
    %v1474 = vunpack.c.h.b16 %v1183
    %v1475 = vunpack.c.l.b16 %v1184
    %v1476 = vunpack.c.h.b16 %v1184
    %v1477 = vunpack.c.l.b16 %v1185
    %v1478 = vunpack.c.h.b16 %v1185
    %v1479 = vunpack.c.l.b16 %v1186
    %v1480 = vunpack.c.h.b16 %v1186
    %v1481 = vunpack.c.l.b16 %v1187
    %v1482 = vunpack.c.h.b16 %v1187
    %v1483 = vunpack.c.l.b16 %v1188
    %v1484 = vunpack.c.h.b16 %v1188
    %v1485 = vunpack.c.l.b16 %v1189
    %v1486 = vunpack.c.h.b16 %v1189
    %v1487 = vunpack.c.l.b16 %v1190
    %v1488 = vunpack.c.h.b16 %v1190
    %v1489 = vunpack.c.l.b16 %v1191
    %v1490 = vunpack.c.h.b16 %v1191
    %v1491 = vunpack.c.l.b16 %v1192
    %v1492 = vunpack.c.h.b16 %v1192
    %v1493 = vunpack.c.l.b16 %v1193
    %v1494 = vunpack.c.h.b16 %v1193
    %v1495 = vunpack.c.l.b16 %v1194
    %v1496 = vunpack.c.h.b16 %v1194
    %v1497 = vunpack.c.l.b16 %v1195
    %v1498 = vunpack.c.h.b16 %v1195
    %v1499 = vunpack.c.l.b16 %v1196
    %v1500 = vunpack.c.h.b16 %v1196
    %v1501 = vunpack.c.l.b16 %v1197
    %v1502 = vunpack.c.h.b16 %v1197
    %v1503 = vunpack.c.l.b16 %v1198
    %v1504 = vunpack.c.h.b16 %v1198
    %v1505 = vunpack.c.l.b16 %v1199
    %v1506 = vunpack.c.h.b16 %v1199
    %v1507 = vunpack.c.l.b16 %v1200
    %v1508 = vunpack.c.h.b16 %v1200
    %v1509 = vunpack.c.l.b16 %v1201
    %v1510 = vunpack.c.h.b16 %v1201
    %v1511 = vunpack.c.l.b16 %v1202
    %v1512 = vunpack.c.h.b16 %v1202
    %v1513 = vunpack.c.l.b16 %v1203
    %v1514 = vunpack.c.h.b16 %v1203
    %v1515 = vunpack.c.l.b16 %v1204
    %v1516 = vunpack.c.h.b16 %v1204
    %v1517 = vunpack.c.l.b16 %v1205
    %v1518 = vunpack.c.h.b16 %v1205
    %v1519 = vunpack.c.l.b16 %v1206
    %v1520 = vunpack.c.h.b16 %v1206
    %v1521 = vunpack.c.l.b16 %v1207
    %v1522 = vunpack.c.h.b16 %v1207
    %v1523 = vunpack.c.l.b16 %v1208
    %v1524 = vunpack.c.h.b16 %v1208
    %v1525 = vunpack.c.l.b16 %v1209
    %v1526 = vunpack.c.h.b16 %v1209
    %v1527 = vunpack.c.l.b16 %v1210
    %v1528 = vunpack.c.h.b16 %v1210
    %v1529 = vunpack.c.l.b16 %v1211
    %v1530 = vunpack.c.h.b16 %v1211
    %v1531 = vunpack.c.l.b16 %v1212
    %v1532 = vunpack.c.h.b16 %v1212
    %v1533 = vunpack.c.l.b16 %v1213
    %v1534 = vunpack.c.h.b16 %v1213
    %v1535 = vunpack.c.l.b16 %v1214
    %v1536 = vunpack.c.h.b16 %v1214
    %v1537 = vunpack.c.l.b16 %v1215
    %v1538 = vunpack.c.h.b16 %v1215
    %v1539 = vunpack.c.l.b16 %v1216
    %v1540 = vunpack.c.h.b16 %v1216
    %v1541 = vunpack.c.l.b16 %v1217
    %v1542 = vunpack.c.h.b16 %v1217
    %v1543 = vunpack.c.l.b16 %v1218
    %v1544 = vunpack.c.h.b16 %v1218
    %v1545 = vunpack.c.l.b16 %v1219
    %v1546 = vunpack.c.h.b16 %v1219
    %v1547 = vunpack.c.l.b16 %v1220
    %v1548 = vunpack.c.h.b16 %v1220
    %v1549 = vunpack.c.l.b16 %v1221
    %v1550 = vunpack.c.h.b16 %v1221
    %v1551 = vunpack.c.l.b16 %v1222
    %v1552 = vunpack.c.h.b16 %v1222
    %v1553 = vunpack.c.l.b16 %v1223
    %v1554 = vunpack.c.h.b16 %v1223
    %v1555 = vunpack.c.l.b16 %v1224
    %v1556 = vunpack.c.h.b16 %v1224
    %v1557 = vunpack.c.l.b16 %v1225
    %v1558 = vunpack.c.h.b16 %v1225
    %v1559 = vunpack.c.l.b16 %v1226
    %v1560 = vunpack.c.h.b16 %v1226
    %v1561 = vunpack.c.l.b16 %v1227
    %v1562 = vunpack.c.h.b16 %v1227
    %v1563 = vunpack.c.l.b16 %v1228
    %v1564 = vunpack.c.h.b16 %v1228
    %v1565 = vunpack.c.l.b16 %v1229
    %v1566 = vunpack.c.h.b16 %v1229
    %v1567 = vunpack.c.l.b16 %v1230
    %v1568 = vunpack.c.h.b16 %v1230
    %v1569 = vunpack.c.l.b16 %v1231
    %v1570 = vunpack.c.h.b16 %v1231
    %v1571 = vunpack.c.l.b16 %v1232
    %v1572 = vunpack.c.h.b16 %v1232
    %v1573 = vunpack.c.l.b16 %v1233
    %v1574 = vunpack.c.h.b16 %v1233
    %v1575 = vunpack.c.l.b16 %v1234
    %v1576 = vunpack.c.h.b16 %v1234
    %v1577 = vunpack.c.l.b16 %v1235
    %v1578 = vunpack.c.h.b16 %v1235
    %v1579 = vunpack.c.l.b16 %v1236
    %v1580 = vunpack.c.h.b16 %v1236
    %v1581 = vunpack.c.l.b16 %v1237
    %v1582 = vunpack.c.h.b16 %v1237
    %v1583 = vunpack.c.l.b16 %v1238
    %v1584 = vunpack.c.h.b16 %v1238
    %v1585 = vunpack.c.l.b16 %v1239
    %v1586 = vunpack.c.h.b16 %v1239
    %v1587 = vunpack.c.l.b16 %v1240
    %v1588 = vunpack.c.h.b16 %v1240
    %v1589 = vunpack.c.l.b16 %v1241
    %v1590 = vunpack.c.h.b16 %v1241
    %v1591 = vunpack.c.l.b16 %v1242
    %v1592 = vunpack.c.h.b16 %v1242
    %v1593 = vunpack.c.l.b16 %v1243
    %v1594 = vunpack.c.h.b16 %v1243
    %v1595 = vunpack.c.l.b16 %v1244
    %v1596 = vunpack.c.h.b16 %v1244
    %v1597 = vunpack.c.l.b16 %v1245
    %v1598 = vunpack.c.h.b16 %v1245
    %v1599 = vunpack.c.l.b16 %v1246
    %v1600 = vunpack.c.h.b16 %v1246
    %v1601 = vunpack.c.l.b16 %v1247
    %v1602 = vunpack.c.h.b16 %v1247
    %v1603 = vunpack.c.l.b16 %v1248
    %v1604 = vunpack.c.h.b16 %v1248
    %v1605 = vunpack.c.l.b16 %v1249
    %v1606 = vunpack.c.h.b16 %v1249
    %v1607 = vunpack.c.l.b16 %v1250
    %v1608 = vunpack.c.h.b16 %v1250
    %v1609 = vunpack.c.l.b16 %v1251
    %v1610 = vunpack.c.h.b16 %v1251
    %v1611 = vunpack.c.l.b16 %v1252
    %v1612 = vunpack.c.h.b16 %v1252
    %v1613 = vunpack.c.l.b16 %v1253
    %v1614 = vunpack.c.h.b16 %v1253
    %v1615 = vunpack.c.l.b16 %v1254
    %v1616 = vunpack.c.h.b16 %v1254
    %v1617 = vunpack.c.l.b16 %v1255
    %v1618 = vunpack.c.h.b16 %v1255
    %v1619 = vunpack.c.l.b16 %v1256
    %v1620 = vunpack.c.h.b16 %v1256
    %v1621 = vunpack.c.l.b16 %v1257
    %v1622 = vunpack.c.h.b16 %v1257
    %v1623 = vunpack.c.l.b16 %v1258
    %v1624 = vunpack.c.h.b16 %v1258
    %v1625 = vunpack.c.l.b16 %v1259
    %v1626 = vunpack.c.h.b16 %v1259
    %v1627 = vunpack.c.l.b16 %v1260
    %v1628 = vunpack.c.h.b16 %v1260
    %v1629 = vunpack.c.l.b16 %v1261
    %v1630 = vunpack.c.h.b16 %v1261
    %v1631 = vunpack.c.l.b16 %v1262
    %v1632 = vunpack.c.h.b16 %v1262
    %v1633 = vunpack.c.l.b16 %v1263
    %v1634 = vunpack.c.h.b16 %v1263
    %v1635 = vunpack.c.l.b16 %v1264
    %v1636 = vunpack.c.h.b16 %v1264
    %v1637 = vunpack.c.l.b16 %v1265
    %v1638 = vunpack.c.h.b16 %v1265
    %v1639 = vunpack.c.l.b16 %v1266
    %v1640 = vunpack.c.h.b16 %v1266
    %v1641 = vunpack.c.l.b16 %v1267
    %v1642 = vunpack.c.h.b16 %v1267
    %v1643 = vunpack.c.l.b16 %v1268
    %v1644 = vunpack.c.h.b16 %v1268
    %v1645 = vunpack.c.l.b16 %v1269
    %v1646 = vunpack.c.h.b16 %v1269
    %v1647 = vunpack.c.l.b16 %v1270
    %v1648 = vunpack.c.h.b16 %v1270
    %v1649 = vunpack.c.l.b16 %v1271
    %v1650 = vunpack.c.h.b16 %v1271
    %v1651 = vunpack.c.l.b16 %v1272
    %v1652 = vunpack.c.h.b16 %v1272
    %v1653 = vunpack.c.l.b16 %v1273
    %v1654 = vunpack.c.h.b16 %v1273
    %v1655 = vunpack.c.l.b16 %v1274
    %v1656 = vunpack.c.h.b16 %v1274
    %v1657 = vunpack.c.l.b16 %v1275
    %v1658 = vunpack.c.h.b16 %v1275
    %v1659 = vunpack.c.l.b16 %v1276
    %v1660 = vunpack.c.h.b16 %v1276
    %v1661 = vunpack.c.l.b16 %v1277
    %v1662 = vunpack.c.h.b16 %v1277
    %v1663 = vunpack.c.l.b16 %v1278
    %v1664 = vunpack.c.h.b16 %v1278
    %v1665 = vunpack.c.l.b16 %v1279
    %v1666 = vunpack.c.h.b16 %v1279
    %v1667 = vunpack.c.l.b16 %v1280
    %v1668 = vunpack.c.h.b16 %v1280
    %v1669 = vunpack.c.l.b16 %v1281
    %v1670 = vunpack.c.h.b16 %v1281
    %v1671 = vpack.c.b16 %v1419, %v1415
    %v1672 = vpack.c.b16 %v1420, %v1416
    %v1673 = vpack.c.b16 %v1421, %v1417
    %v1674 = vpack.c.b16 %v1422, %v1418
    %v1675 = vpack.c.b16 %v1427, %v1423
    %v1676 = vpack.c.b16 %v1428, %v1424
    %v1677 = vpack.c.b16 %v1429, %v1425
    %v1678 = vpack.c.b16 %v1430, %v1426
    %v1679 = vpack.c.b16 %v1435, %v1431
    %v1680 = vpack.c.b16 %v1436, %v1432
    %v1681 = vpack.c.b16 %v1437, %v1433
    %v1682 = vpack.c.b16 %v1438, %v1434
    %v1683 = vpack.c.b16 %v1443, %v1439
    %v1684 = vpack.c.b16 %v1444, %v1440
    %v1685 = vpack.c.b16 %v1445, %v1441
    %v1686 = vpack.c.b16 %v1446, %v1442
    %v1687 = vpack.c.b16 %v1451, %v1447
    %v1688 = vpack.c.b16 %v1452, %v1448
    %v1689 = vpack.c.b16 %v1453, %v1449
    %v1690 = vpack.c.b16 %v1454, %v1450
    %v1691 = vpack.c.b16 %v1459, %v1455
    %v1692 = vpack.c.b16 %v1460, %v1456
    %v1693 = vpack.c.b16 %v1461, %v1457
    %v1694 = vpack.c.b16 %v1462, %v1458
    %v1695 = vpack.c.b16 %v1467, %v1463
    %v1696 = vpack.c.b16 %v1468, %v1464
    %v1697 = vpack.c.b16 %v1469, %v1465
    %v1698 = vpack.c.b16 %v1470, %v1466
    %v1699 = vpack.c.b16 %v1475, %v1471
    %v1700 = vpack.c.b16 %v1476, %v1472
    %v1701 = vpack.c.b16 %v1477, %v1473
    %v1702 = vpack.c.b16 %v1478, %v1474
    %v1703 = vpack.c.b16 %v1483, %v1479
    %v1704 = vpack.c.b16 %v1484, %v1480
    %v1705 = vpack.c.b16 %v1485, %v1481
    %v1706 = vpack.c.b16 %v1486, %v1482
    %v1707 = vpack.c.b16 %v1491, %v1487
    %v1708 = vpack.c.b16 %v1492, %v1488
    %v1709 = vpack.c.b16 %v1493, %v1489
    %v1710 = vpack.c.b16 %v1494, %v1490
    %v1711 = vpack.c.b16 %v1499, %v1495
    %v1712 = vpack.c.b16 %v1500, %v1496
    %v1713 = vpack.c.b16 %v1501, %v1497
    %v1714 = vpack.c.b16 %v1502, %v1498
    %v1715 = vpack.c.b16 %v1507, %v1503
    %v1716 = vpack.c.b16 %v1508, %v1504
    %v1717 = vpack.c.b16 %v1509, %v1505
    %v1718 = vpack.c.b16 %v1510, %v1506
    %v1719 = vpack.c.b16 %v1515, %v1511
    %v1720 = vpack.c.b16 %v1516, %v1512
    %v1721 = vpack.c.b16 %v1517, %v1513
    %v1722 = vpack.c.b16 %v1518, %v1514
    %v1723 = vpack.c.b16 %v1523, %v1519
    %v1724 = vpack.c.b16 %v1524, %v1520
    %v1725 = vpack.c.b16 %v1525, %v1521
    %v1726 = vpack.c.b16 %v1526, %v1522
    %v1727 = vpack.c.b16 %v1531, %v1527
    %v1728 = vpack.c.b16 %v1532, %v1528
    %v1729 = vpack.c.b16 %v1533, %v1529
    %v1730 = vpack.c.b16 %v1534, %v1530
    %v1731 = vpack.c.b16 %v1539, %v1535
    %v1732 = vpack.c.b16 %v1540, %v1536
    %v1733 = vpack.c.b16 %v1541, %v1537
    %v1734 = vpack.c.b16 %v1542, %v1538
    %v1735 = vpack.c.b16 %v1547, %v1543
    %v1736 = vpack.c.b16 %v1548, %v1544
    %v1737 = vpack.c.b16 %v1549, %v1545
    %v1738 = vpack.c.b16 %v1550, %v1546
    %v1739 = vpack.c.b16 %v1555, %v1551
    %v1740 = vpack.c.b16 %v1556, %v1552
    %v1741 = vpack.c.b16 %v1557, %v1553
    %v1742 = vpack.c.b16 %v1558, %v1554
    %v1743 = vpack.c.b16 %v1563, %v1559
    %v1744 = vpack.c.b16 %v1564, %v1560
    %v1745 = vpack.c.b16 %v1565, %v1561
    %v1746 = vpack.c.b16 %v1566, %v1562
    %v1747 = vpack.c.b16 %v1571, %v1567
    %v1748 = vpack.c.b16 %v1572, %v1568
    %v1749 = vpack.c.b16 %v1573, %v1569
    %v1750 = vpack.c.b16 %v1574, %v1570
    %v1751 = vpack.c.b16 %v1579, %v1575
    %v1752 = vpack.c.b16 %v1580, %v1576
    %v1753 = vpack.c.b16 %v1581, %v1577
    %v1754 = vpack.c.b16 %v1582, %v1578
    %v1755 = vpack.c.b16 %v1587, %v1583
    %v1756 = vpack.c.b16 %v1588, %v1584
    %v1757 = vpack.c.b16 %v1589, %v1585
    %v1758 = vpack.c.b16 %v1590, %v1586
    %v1759 = vpack.c.b16 %v1595, %v1591
    %v1760 = vpack.c.b16 %v1596, %v1592
    %v1761 = vpack.c.b16 %v1597, %v1593
    %v1762 = vpack.c.b16 %v1598, %v1594
    %v1763 = vpack.c.b16 %v1603, %v1599
    %v1764 = vpack.c.b16 %v1604, %v1600
    %v1765 = vpack.c.b16 %v1605, %v1601
    %v1766 = vpack.c.b16 %v1606, %v1602
    %v1767 = vpack.c.b16 %v1611, %v1607
    %v1768 = vpack.c.b16 %v1612, %v1608
    %v1769 = vpack.c.b16 %v1613, %v1609
    %v1770 = vpack.c.b16 %v1614, %v1610
    %v1771 = vpack.c.b16 %v1619, %v1615
    %v1772 = vpack.c.b16 %v1620, %v1616
    %v1773 = vpack.c.b16 %v1621, %v1617
    %v1774 = vpack.c.b16 %v1622, %v1618
    %v1775 = vpack.c.b16 %v1627, %v1623
    %v1776 = vpack.c.b16 %v1628, %v1624
    %v1777 = vpack.c.b16 %v1629, %v1625
    %v1778 = vpack.c.b16 %v1630, %v1626
    %v1779 = vpack.c.b16 %v1635, %v1631
    %v1780 = vpack.c.b16 %v1636, %v1632
    %v1781 = vpack.c.b16 %v1637, %v1633
    %v1782 = vpack.c.b16 %v1638, %v1634
    %v1783 = vpack.c.b16 %v1643, %v1639
    %v1784 = vpack.c.b16 %v1644, %v1640
    %v1785 = vpack.c.b16 %v1645, %v1641
    %v1786 = vpack.c.b16 %v1646, %v1642
    %v1787 = vpack.c.b16 %v1651, %v1647
    %v1788 = vpack.c.b16 %v1652, %v1648
    %v1789 = vpack.c.b16 %v1653, %v1649
    %v1790 = vpack.c.b16 %v1654, %v1650
    %v1791 = vpack.c.b16 %v1659, %v1655
    %v1792 = vpack.c.b16 %v1660, %v1656
    %v1793 = vpack.c.b16 %v1661, %v1657
    %v1794 = vpack.c.b16 %v1662, %v1658
    %v1795 = vpack.c.b16 %v1667, %v1663
    %v1796 = vpack.c.b16 %v1668, %v1664
    %v1797 = vpack.c.b16 %v1669, %v1665
    %v1798 = vpack.c.b16 %v1670, %v1666
    %1927 = vmatpush.bf16.msra.mxu0 %v1699
    %1928 = vmatpush.bf16.msra.mxu0 %v1695
    %1929 = vmatpush.bf16.msra.mxu0 %v1691
    %1930 = vmatpush.bf16.msra.mxu0 %v1687
    %1931 = vmatpush.bf16.msra.mxu0 %v1683
    %1932 = vmatpush.bf16.msra.mxu0 %v1679
    %1933 = vmatpush.bf16.msra.mxu0 %v1675
    %1934 = vmatpush.bf16.msra.mxu0 %v1671
    %1935 = vmatmul.bf16.gmra.mxu0 %v1150
    %v1936 = vpop.f32.mrf.mxu0
    %v1937 = vadd.f32 %v1285, %v1936
    %v1938 = vpop.f32.mrf.mxu0
    %1939 = vdwg.mxu0
    %1940 = vmatpush.bf16.msra.mxu0 %v1731
    %1941 = vmatpush.bf16.msra.mxu0 %v1727
    %1942 = vmatpush.bf16.msra.mxu0 %v1723
    %1943 = vmatpush.bf16.msra.mxu0 %v1719
    %1944 = vmatpush.bf16.msra.mxu0 %v1715
    %1945 = vmatpush.bf16.msra.mxu0 %v1711
    %1946 = vmatpush.bf16.msra.mxu0 %v1707
    %1947 = vmatpush.bf16.msra.mxu0 %v1703
    %1948 = vmatmul.bf16.gmra.mxu0 %v1151
    %v1949 = vpop.f32.mrf.mxu0
    %v1950 = vadd.f32 %v1937, %v1949
    %v1951 = vpop.f32.mrf.mxu0
    %1952 = vdwg.mxu0
    %1953 = vmatpush.bf16.msra.mxu0 %v1763
    %1954 = vmatpush.bf16.msra.mxu0 %v1759
    %1955 = vmatpush.bf16.msra.mxu0 %v1755
    %1956 = vmatpush.bf16.msra.mxu0 %v1751
    %1957 = vmatpush.bf16.msra.mxu0 %v1747
    %1958 = vmatpush.bf16.msra.mxu0 %v1743
    %1959 = vmatpush.bf16.msra.mxu0 %v1739
    %1960 = vmatpush.bf16.msra.mxu0 %v1735
    %1961 = vmatmul.bf16.gmra.mxu0 %v1152
    %v1962 = vpop.f32.mrf.mxu0
    %v1963 = vadd.f32 %v1950, %v1962
    %v1964 = vpop.f32.mrf.mxu0
    %1965 = vdwg.mxu0
    %1966 = vmatpush.bf16.msra.mxu0 %v1795
    %1967 = vmatpush.bf16.msra.mxu0 %v1791
    %1968 = vmatpush.bf16.msra.mxu0 %v1787
    %1969 = vmatpush.bf16.msra.mxu0 %v1783
    %1970 = vmatpush.bf16.msra.mxu0 %v1779
    %1971 = vmatpush.bf16.msra.mxu0 %v1775
    %1972 = vmatpush.bf16.msra.mxu0 %v1771
    %1973 = vmatpush.bf16.msra.mxu0 %v1767
    %1974 = vmatmul.bf16.gmra.mxu0 %v1153
    %v1975 = vpop.f32.mrf.mxu0
    %v1976 = vadd.f32 %v1963, %v1975
    %v1977 = vpop.f32.mrf.mxu0
    %1978 = vdwg.mxu0
    %1979 = vmatpush.bf16.msra.mxu0 %v1700
    %1980 = vmatpush.bf16.msra.mxu0 %v1696
    %1981 = vmatpush.bf16.msra.mxu0 %v1692
    %1982 = vmatpush.bf16.msra.mxu0 %v1688
    %1983 = vmatpush.bf16.msra.mxu0 %v1684
    %1984 = vmatpush.bf16.msra.mxu0 %v1680
    %1985 = vmatpush.bf16.msra.mxu0 %v1676
    %1986 = vmatpush.bf16.msra.mxu0 %v1672
    %1987 = vmatmul.bf16.gmra.mxu0 %v1150
    %v1988 = vpop.f32.mrf.mxu0
    %v1989 = vadd.f32 %v1285, %v1988
    %v1990 = vpop.f32.mrf.mxu0
    %1991 = vdwg.mxu0
    %1992 = vmatpush.bf16.msra.mxu0 %v1732
    %1993 = vmatpush.bf16.msra.mxu0 %v1728
    %1994 = vmatpush.bf16.msra.mxu0 %v1724
    %1995 = vmatpush.bf16.msra.mxu0 %v1720
    %1996 = vmatpush.bf16.msra.mxu0 %v1716
    %1997 = vmatpush.bf16.msra.mxu0 %v1712
    %1998 = vmatpush.bf16.msra.mxu0 %v1708
    %1999 = vmatpush.bf16.msra.mxu0 %v1704
    %2000 = vmatmul.bf16.gmra.mxu0 %v1151
    %v2001 = vpop.f32.mrf.mxu0
    %v2002 = vadd.f32 %v1989, %v2001
    %v2003 = vpop.f32.mrf.mxu0
    %2004 = vdwg.mxu0
    %2005 = vmatpush.bf16.msra.mxu0 %v1764
    %2006 = vmatpush.bf16.msra.mxu0 %v1760
    %2007 = vmatpush.bf16.msra.mxu0 %v1756
    %2008 = vmatpush.bf16.msra.mxu0 %v1752
    %2009 = vmatpush.bf16.msra.mxu0 %v1748
    %2010 = vmatpush.bf16.msra.mxu0 %v1744
    %2011 = vmatpush.bf16.msra.mxu0 %v1740
    %2012 = vmatpush.bf16.msra.mxu0 %v1736
    %2013 = vmatmul.bf16.gmra.mxu0 %v1152
    %v2014 = vpop.f32.mrf.mxu0
    %v2015 = vadd.f32 %v2002, %v2014
    %v2016 = vpop.f32.mrf.mxu0
    %2017 = vdwg.mxu0
    %2018 = vmatpush.bf16.msra.mxu0 %v1796
    %2019 = vmatpush.bf16.msra.mxu0 %v1792
    %2020 = vmatpush.bf16.msra.mxu0 %v1788
    %2021 = vmatpush.bf16.msra.mxu0 %v1784
    %2022 = vmatpush.bf16.msra.mxu0 %v1780
    %2023 = vmatpush.bf16.msra.mxu0 %v1776
    %2024 = vmatpush.bf16.msra.mxu0 %v1772
    %2025 = vmatpush.bf16.msra.mxu0 %v1768
    %2026 = vmatmul.bf16.gmra.mxu0 %v1153
    %v2027 = vpop.f32.mrf.mxu0
    %v2028 = vadd.f32 %v2015, %v2027
    %v2029 = vpop.f32.mrf.mxu0
    %2030 = vdwg.mxu0
    %2031 = vmatpush.bf16.msra.mxu0 %v1701
    %2032 = vmatpush.bf16.msra.mxu0 %v1697
    %2033 = vmatpush.bf16.msra.mxu0 %v1693
    %2034 = vmatpush.bf16.msra.mxu0 %v1689
    %2035 = vmatpush.bf16.msra.mxu0 %v1685
    %2036 = vmatpush.bf16.msra.mxu0 %v1681
    %2037 = vmatpush.bf16.msra.mxu0 %v1677
    %2038 = vmatpush.bf16.msra.mxu0 %v1673
    %2039 = vmatmul.bf16.gmra.mxu0 %v1150
    %v2040 = vpop.f32.mrf.mxu0
    %v2041 = vadd.f32 %v1285, %v2040
    %v2042 = vpop.f32.mrf.mxu0
    %2043 = vdwg.mxu0
    %2044 = vmatpush.bf16.msra.mxu0 %v1733
    %2045 = vmatpush.bf16.msra.mxu0 %v1729
    %2046 = vmatpush.bf16.msra.mxu0 %v1725
    %2047 = vmatpush.bf16.msra.mxu0 %v1721
    %2048 = vmatpush.bf16.msra.mxu0 %v1717
    %2049 = vmatpush.bf16.msra.mxu0 %v1713
    %2050 = vmatpush.bf16.msra.mxu0 %v1709
    %2051 = vmatpush.bf16.msra.mxu0 %v1705
    %2052 = vmatmul.bf16.gmra.mxu0 %v1151
    %v2053 = vpop.f32.mrf.mxu0
    %v2054 = vadd.f32 %v2041, %v2053
    %v2055 = vpop.f32.mrf.mxu0
    %2056 = vdwg.mxu0
    %2057 = vmatpush.bf16.msra.mxu0 %v1765
    %2058 = vmatpush.bf16.msra.mxu0 %v1761
    %2059 = vmatpush.bf16.msra.mxu0 %v1757
    %2060 = vmatpush.bf16.msra.mxu0 %v1753
    %2061 = vmatpush.bf16.msra.mxu0 %v1749
    %2062 = vmatpush.bf16.msra.mxu0 %v1745
    %2063 = vmatpush.bf16.msra.mxu0 %v1741
    %2064 = vmatpush.bf16.msra.mxu0 %v1737
    %2065 = vmatmul.bf16.gmra.mxu0 %v1152
    %v2066 = vpop.f32.mrf.mxu0
    %v2067 = vadd.f32 %v2054, %v2066
    %v2068 = vpop.f32.mrf.mxu0
    %2069 = vdwg.mxu0
    %2070 = vmatpush.bf16.msra.mxu0 %v1797
    %2071 = vmatpush.bf16.msra.mxu0 %v1793
    %2072 = vmatpush.bf16.msra.mxu0 %v1789
    %2073 = vmatpush.bf16.msra.mxu0 %v1785
    %2074 = vmatpush.bf16.msra.mxu0 %v1781
    %2075 = vmatpush.bf16.msra.mxu0 %v1777
    %2076 = vmatpush.bf16.msra.mxu0 %v1773
    %2077 = vmatpush.bf16.msra.mxu0 %v1769
    %2078 = vmatmul.bf16.gmra.mxu0 %v1153
    %v2079 = vpop.f32.mrf.mxu0
    %v2080 = vadd.f32 %v2067, %v2079
    %v2081 = vpop.f32.mrf.mxu0
    %2082 = vdwg.mxu0
    %2083 = vmatpush.bf16.msra.mxu0 %v1702
    %2084 = vmatpush.bf16.msra.mxu0 %v1698
    %2085 = vmatpush.bf16.msra.mxu0 %v1694
    %2086 = vmatpush.bf16.msra.mxu0 %v1690
    %2087 = vmatpush.bf16.msra.mxu0 %v1686
    %2088 = vmatpush.bf16.msra.mxu0 %v1682
    %2089 = vmatpush.bf16.msra.mxu0 %v1678
    %2090 = vmatpush.bf16.msra.mxu0 %v1674
    %2091 = vmatmul.bf16.gmra.mxu0 %v1150
    %v2092 = vpop.f32.mrf.mxu0
    %v2093 = vadd.f32 %v1285, %v2092
    %v2094 = vpop.f32.mrf.mxu0
    %2095 = vdwg.mxu0
    %2096 = vmatpush.bf16.msra.mxu0 %v1734
    %2097 = vmatpush.bf16.msra.mxu0 %v1730
    %2098 = vmatpush.bf16.msra.mxu0 %v1726
    %2099 = vmatpush.bf16.msra.mxu0 %v1722
    %2100 = vmatpush.bf16.msra.mxu0 %v1718
    %2101 = vmatpush.bf16.msra.mxu0 %v1714
    %2102 = vmatpush.bf16.msra.mxu0 %v1710
    %2103 = vmatpush.bf16.msra.mxu0 %v1706
    %2104 = vmatmul.bf16.gmra.mxu0 %v1151
    %v2105 = vpop.f32.mrf.mxu0
    %v2106 = vadd.f32 %v2093, %v2105
    %v2107 = vpop.f32.mrf.mxu0
    %2108 = vdwg.mxu0
    %2109 = vmatpush.bf16.msra.mxu0 %v1766
    %2110 = vmatpush.bf16.msra.mxu0 %v1762
    %2111 = vmatpush.bf16.msra.mxu0 %v1758
    %2112 = vmatpush.bf16.msra.mxu0 %v1754
    %2113 = vmatpush.bf16.msra.mxu0 %v1750
    %2114 = vmatpush.bf16.msra.mxu0 %v1746
    %2115 = vmatpush.bf16.msra.mxu0 %v1742
    %2116 = vmatpush.bf16.msra.mxu0 %v1738
    %2117 = vmatmul.bf16.gmra.mxu0 %v1152
    %v2118 = vpop.f32.mrf.mxu0
    %v2119 = vadd.f32 %v2106, %v2118
    %v2120 = vpop.f32.mrf.mxu0
    %2121 = vdwg.mxu0
    %2122 = vmatpush.bf16.msra.mxu0 %v1798
    %2123 = vmatpush.bf16.msra.mxu0 %v1794
    %2124 = vmatpush.bf16.msra.mxu0 %v1790
    %2125 = vmatpush.bf16.msra.mxu0 %v1786
    %2126 = vmatpush.bf16.msra.mxu0 %v1782
    %2127 = vmatpush.bf16.msra.mxu0 %v1778
    %2128 = vmatpush.bf16.msra.mxu0 %v1774
    %2129 = vmatpush.bf16.msra.mxu0 %v1770
    %2130 = vmatmul.bf16.gmra.mxu0 %v1153
    %v2131 = vpop.f32.mrf.mxu0
    %v2132 = vadd.f32 %v2119, %v2131
    %v2133 = vpop.f32.mrf.mxu0
    %2134 = vdwg.mxu0
    %v2135 = vlaneseq
    %v2136 = vand.u32 %v2135, 127
    %v2137 = vadd.s32 %v2136, 128
    %v2138 = vadd.s32 %v2136, 256
    %v2139 = vadd.s32 %v2136, 384
    %s2140 = smul.u32 0, 512
    %s2141 = sadd.s32 %s2140, 1
    %v2142 = vstv %s2141
    %v2143 = vadd.s32 %v2136, %v2142
    %v2144 = vadd.s32 %v2137, %v2142
    %v2145 = vadd.s32 %v2138, %v2142
    %v2146 = vadd.s32 %v2139, %v2142
    %v2147 = vcvt.s32.f32 %v2143
    %v2148 = vcvt.s32.f32 %v2144
    %v2149 = vcvt.s32.f32 %v2145
    %v2150 = vcvt.s32.f32 %v2146
    %2152 = vset.pattern.permute.xlu0 0
    %2153 = vperm.xlu0 %2152, %v1135
    %v2154 = vpop.permute.xlu0 %2153
    %v2156 = vsub.f32 %v2154, %v1976
    %v2157 = vsub.f32 %v2154, %v2028
    %v2158 = vsub.f32 %v2154, %v2080
    %v2159 = vsub.f32 %v2154, %v2132
    %v2160 = vsub.f32 %v2147, %v1976
    %v2161 = vsub.f32 %v2148, %v2028
    %v2162 = vsub.f32 %v2149, %v2080
    %v2163 = vsub.f32 %v2150, %v2132
    %v2164 = vadd.f32 %v2154, %v2160
    %v2165 = vadd.f32 %v2154, %v2161
    %v2166 = vadd.f32 %v2154, %v2162
    %v2167 = vadd.f32 %v2154, %v2163
    %v2168 = vrcp.pop %v2164
    %v2169 = vmul.f32 %v2164, %v2168
    %v2170 = vsub.f32 1.0, %v2169
    %v2171 = vmul.f32 %v2168, %v2170
    %v2172 = vadd.f32 %v2168, %v2171
    %vm2173 = vweird.f32 %v2164
    %vm2174 = vweird.f32 %v2168
    %vm2175 = vmor %vm2173, %vm2174
    %v2176 = vsel %vm2175, %v2168, %v2172
    %v2177 = vand.u32 2147483647, %v2164
    %vm2178 = vcmp.eq.f32.partialorder %v2177, 8.507059e+37
    %v2179 = vand.u32 %v2164, 2147483648
    %v2180 = vor.u32 1.1754944e-38, %v2179
    %v2181 = vsel %vm2178, %v2180, %v2176
    %v2182 = vmul.f32 %v2156, %v2181
    %v2183 = vrcp.pop %v2165
    %v2184 = vmul.f32 %v2165, %v2183
    %v2185 = vsub.f32 1.0, %v2184
    %v2186 = vmul.f32 %v2183, %v2185
    %v2187 = vadd.f32 %v2183, %v2186
    %vm2188 = vweird.f32 %v2165
    %vm2189 = vweird.f32 %v2183
    %vm2190 = vmor %vm2188, %vm2189
    %v2191 = vsel %vm2190, %v2183, %v2187
    %v2192 = vand.u32 2147483647, %v2165
    %vm2193 = vcmp.eq.f32.partialorder %v2192, 8.507059e+37
    %v2194 = vand.u32 %v2165, 2147483648
    %v2195 = vor.u32 1.1754944e-38, %v2194
    %v2196 = vsel %vm2193, %v2195, %v2191
    %v2197 = vmul.f32 %v2157, %v2196
    %v2198 = vrcp.pop %v2166
    %v2199 = vmul.f32 %v2166, %v2198
    %v2200 = vsub.f32 1.0, %v2199
    %v2201 = vmul.f32 %v2198, %v2200
    %v2202 = vadd.f32 %v2198, %v2201
    %vm2203 = vweird.f32 %v2166
    %vm2204 = vweird.f32 %v2198
    %vm2205 = vmor %vm2203, %vm2204
    %v2206 = vsel %vm2205, %v2198, %v2202
    %v2207 = vand.u32 2147483647, %v2166
    %vm2208 = vcmp.eq.f32.partialorder %v2207, 8.507059e+37
    %v2209 = vand.u32 %v2166, 2147483648
    %v2210 = vor.u32 1.1754944e-38, %v2209
    %v2211 = vsel %vm2208, %v2210, %v2206
    %v2212 = vmul.f32 %v2158, %v2211
    %v2213 = vrcp.pop %v2167
    %v2214 = vmul.f32 %v2167, %v2213
    %v2215 = vsub.f32 1.0, %v2214
    %v2216 = vmul.f32 %v2213, %v2215
    %v2217 = vadd.f32 %v2213, %v2216
    %vm2218 = vweird.f32 %v2167
    %vm2219 = vweird.f32 %v2213
    %vm2220 = vmor %vm2218, %vm2219
    %v2221 = vsel %vm2220, %v2213, %v2217
    %v2222 = vand.u32 2147483647, %v2167
    %vm2223 = vcmp.eq.f32.partialorder %v2222, 8.507059e+37
    %v2224 = vand.u32 %v2167, 2147483648
    %v2225 = vor.u32 1.1754944e-38, %v2224
    %v2226 = vsel %vm2223, %v2225, %v2221
    %v2227 = vmul.f32 %v2159, %v2226
    %v2228 = vsub.f32 1.0, %v2182
    %v2229 = vsub.f32 1.0, %v2197
    %v2230 = vsub.f32 1.0, %v2212
    %v2231 = vsub.f32 1.0, %v2227
    %2232 = vst [vmem:[#allocation1] ss:$2 sm:$0xff] %v1120
    %s2233 = scalar_lea.vmem [#allocation1], 16
    %2234 = vst [vmem:[%s2233] ss:$2 sm:$0xff] %v1121
    %v2235 = vld.sshfl [vmem:[#allocation1] sm:$0xff pattern:$0x75316420]
    %v2236 = vld.sshfl [vmem:[#allocation1 + $0x8] sm:$0xff pattern:$0x75316420]
    %v2237 = vld.sshfl [vmem:[#allocation1 + $0x10] sm:$0xff pattern:$0x75316420]
    %v2238 = vld.sshfl [vmem:[#allocation1 + $0x18] sm:$0xff pattern:$0x75316420]
    %v2243 = vsub.f32 %v1976, %v2235
    %v2244 = vsub.f32 %v2028, %v2236
    %v2245 = vsub.f32 %v2080, %v2237
    %v2246 = vsub.f32 %v2132, %v2238
    %v2247 = vsub.f32 %v2147, 1.0
    %v2248 = vsub.f32 %v2148, 1.0
    %v2249 = vsub.f32 %v2149, 1.0
    %v2250 = vsub.f32 %v2150, 1.0
    %v2251 = vsub.f32 %v2247, %v2243
    %v2252 = vsub.f32 %v2248, %v2244
    %v2253 = vsub.f32 %v2249, %v2245
    %v2254 = vsub.f32 %v2250, %v2246
    %v2255 = vadd.f32 %v2154, %v2251
    %v2256 = vadd.f32 %v2154, %v2252
    %v2257 = vadd.f32 %v2154, %v2253
    %v2258 = vadd.f32 %v2154, %v2254
    %vm2259 = vcmp.gt.f32.partialorder %v2255, 0.0
    %vm2260 = vcmp.gt.f32.partialorder %v2256, 0.0
    %vm2261 = vcmp.gt.f32.partialorder %v2257, 0.0
    %vm2262 = vcmp.gt.f32.partialorder %v2258, 0.0
    %v2263 = vsub.f32 %v2154, %v2243
    %v2264 = vsub.f32 %v2154, %v2244
    %v2265 = vsub.f32 %v2154, %v2245
    %v2266 = vsub.f32 %v2154, %v2246
    %v2267 = vrcp.pop %v2255
    %v2268 = vmul.f32 %v2255, %v2267
    %v2269 = vsub.f32 1.0, %v2268
    %v2270 = vmul.f32 %v2267, %v2269
    %v2271 = vadd.f32 %v2267, %v2270
    %vm2272 = vweird.f32 %v2255
    %vm2273 = vweird.f32 %v2267
    %vm2274 = vmor %vm2272, %vm2273
    %v2275 = vsel %vm2274, %v2267, %v2271
    %v2276 = vand.u32 2147483647, %v2255
    %vm2277 = vcmp.eq.f32.partialorder %v2276, 8.507059e+37
    %v2278 = vand.u32 %v2255, 2147483648
    %v2279 = vor.u32 1.1754944e-38, %v2278
    %v2280 = vsel %vm2277, %v2279, %v2275
    %v2281 = vmul.f32 %v2263, %v2280
    %v2282 = vrcp.pop %v2256
    %v2283 = vmul.f32 %v2256, %v2282
    %v2284 = vsub.f32 1.0, %v2283
    %v2285 = vmul.f32 %v2282, %v2284
    %v2286 = vadd.f32 %v2282, %v2285
    %vm2287 = vweird.f32 %v2256
    %vm2288 = vweird.f32 %v2282
    %vm2289 = vmor %vm2287, %vm2288
    %v2290 = vsel %vm2289, %v2282, %v2286
    %v2291 = vand.u32 2147483647, %v2256
    %vm2292 = vcmp.eq.f32.partialorder %v2291, 8.507059e+37
    %v2293 = vand.u32 %v2256, 2147483648
    %v2294 = vor.u32 1.1754944e-38, %v2293
    %v2295 = vsel %vm2292, %v2294, %v2290
    %v2296 = vmul.f32 %v2264, %v2295
    %v2297 = vrcp.pop %v2257
    %v2298 = vmul.f32 %v2257, %v2297
    %v2299 = vsub.f32 1.0, %v2298
    %v2300 = vmul.f32 %v2297, %v2299
    %v2301 = vadd.f32 %v2297, %v2300
    %vm2302 = vweird.f32 %v2257
    %vm2303 = vweird.f32 %v2297
    %vm2304 = vmor %vm2302, %vm2303
    %v2305 = vsel %vm2304, %v2297, %v2301
    %v2306 = vand.u32 2147483647, %v2257
    %vm2307 = vcmp.eq.f32.partialorder %v2306, 8.507059e+37
    %v2308 = vand.u32 %v2257, 2147483648
    %v2309 = vor.u32 1.1754944e-38, %v2308
    %v2310 = vsel %vm2307, %v2309, %v2305
    %v2311 = vmul.f32 %v2265, %v2310
    %v2312 = vrcp.pop %v2258
    %v2313 = vmul.f32 %v2258, %v2312
    %v2314 = vsub.f32 1.0, %v2313
    %v2315 = vmul.f32 %v2312, %v2314
    %v2316 = vadd.f32 %v2312, %v2315
    %vm2317 = vweird.f32 %v2258
    %vm2318 = vweird.f32 %v2312
    %vm2319 = vmor %vm2317, %vm2318
    %v2320 = vsel %vm2319, %v2312, %v2316
    %v2321 = vand.u32 2147483647, %v2258
    %vm2322 = vcmp.eq.f32.partialorder %v2321, 8.507059e+37
    %v2323 = vand.u32 %v2258, 2147483648
    %v2324 = vor.u32 1.1754944e-38, %v2323
    %v2325 = vsel %vm2322, %v2324, %v2320
    %v2326 = vmul.f32 %v2266, %v2325
    %v2327 = vsub.f32 1.0, %v2281
    %v2328 = vsub.f32 1.0, %v2296
    %v2329 = vsub.f32 1.0, %v2311
    %v2330 = vsub.f32 1.0, %v2326
    %v2331 = vsel %vm2259, %v2327, 0.0
    %v2332 = vsel %vm2260, %v2328, 0.0
    %v2333 = vsel %vm2261, %v2329, 0.0
    %v2334 = vsel %vm2262, %v2330, 0.0
    %v2335 = vsub.f32 %v2228, %v2331
    %v2336 = vsub.f32 %v2229, %v2332
    %v2337 = vsub.f32 %v2230, %v2333
    %v2338 = vsub.f32 %v2231, %v2334
    %v2339 = vmul.f32 %v1127, %v2335
    %v2340 = vmul.f32 %v1128, %v2336
    %v2341 = vmul.f32 %v1129, %v2337
    %v2342 = vmul.f32 %v1130, %v2338
    %vm2343 = vcmask 1043456
    %v2344 = vsel %vm2343, %v2339, 0.0
    %v2345 = vsel %vm2343, %v2340, 0.0
    %v2346 = vadd.f32 %v2344, %v2345
    %v2347 = vsel %vm2343, %v2341, 0.0
    %v2348 = vadd.f32 %v2346, %v2347
    %v2349 = vsel %vm2343, %v2342, 0.0
    %v2350 = vadd.f32 %v2348, %v2349
    %2351 = vadd.xlane.f32.xlu0 %v2350
    %v2352 = vpop.xlane.xlu0 %2351
    %v2353 = vld [vmem:[#allocation4] sm:$0x1]
    %v2354 = vsel %vm2343, %v2352, 0.0
    %v2355 = vrot.slane %v2354, 4
    %v2356 = vadd.f32 %v2354, %v2355
    %v2357 = vrot.slane %v2356, 2
    %v2358 = vadd.f32 %v2356, %v2357
    %v2359 = vrot.slane %v2358, 1
    %v2360 = vadd.f32 %v2358, %v2359
    %v2361 = vmul.f32 %v2360, 0.25
    %v2362 = vadd.f32 %v2353, %v2361
    %vm2363 = vcmask 0
    %2364 = vst.msk [vmem:[#allocation4] sm:$0x1] %vm2363, %v2362
    %2365 = vst [vmem:[#allocation1] ss:$2 sm:$0xff] %v1120
    %s2366 = scalar_lea.vmem [#allocation1], 16
    %2367 = vst [vmem:[%s2366] ss:$2 sm:$0xff] %v1121
    %v2368 = vld.sshfl [vmem:[#allocation1] sm:$0xff pattern:$0x75316420]
    %v2369 = vld.sshfl [vmem:[#allocation1 + $0x8] sm:$0xff pattern:$0x75316420]
    %v2370 = vld.sshfl [vmem:[#allocation1 + $0x10] sm:$0xff pattern:$0x75316420]
    %v2371 = vld.sshfl [vmem:[#allocation1 + $0x18] sm:$0xff pattern:$0x75316420]
    %v2376 = vsel %vm2343, %v2368, 0.0
    %v2377 = vsel %vm2343, %v2369, 0.0
    %v2378 = vadd.f32 %v2376, %v2377
    %v2379 = vsel %vm2343, %v2370, 0.0
    %v2380 = vadd.f32 %v2378, %v2379
    %v2381 = vsel %vm2343, %v2371, 0.0
    %v2382 = vadd.f32 %v2380, %v2381
    %2383 = vadd.xlane.f32.xlu0 %v2382
    %v2384 = vpop.xlane.xlu0 %2383
    %v2385 = vadd.f32 %v1136, %v2384
    %vm2386 = vcmask 3072
    %2387 = vst.msk [vmem:[#allocation3] sm:$0xf] %vm2386, %v2385
    // Predicated region
    $region14: #{loce_loss_2d.3} parent=1 // pred_check
      _
    $region15: #{loce_loss_2d.3} parent=1 // pred_check_branch
      %2389 = sbr.rel (0) target = $region17
    $region16: #{loce_loss_2d.3} parent=1 // pred_region
      %2391 = vsyncadd [#allocation5], 0
      %s2393 = sshll.u32 [#allocation4], 4
      %s2394 = int_to_ptr.vmem [resolvable:$true] %s2393
      %s2395 = sshll.u32 %s2, 4
      %s2396 = int_to_ptr.hbm [resolvable:$true] %s2395
      %2398 = dma.vmem_to_hbm [thread:$0]  %s2394, 16, %s2396, [#allocation5]
    $region17: #{loce_loss_2d.3} parent=1 // pred_fallthru
      _
    // Predicated region
    $region18: #{loce_loss_2d.3} parent=1 // pred_check
      _
    $region19: #{loce_loss_2d.3} parent=1 // pred_check_branch
      %2400 = sbr.rel (0) target = $region21
    $region20: #{loce_loss_2d.3} parent=1 // pred_region
      %2402 = dma.done [#allocation5], 16
    $region21: #{loce_loss_2d.3} parent=1 // pred_fallthru
      _
    %2403 = vsyncpa [#allocation5], 1

</llo_original>
